<compile_context>
chip_gen: v5e
topology: v5e:2x2
jax: 0.10.0
libtpu: 0.0.40
codegen_flags: <defaults>
</compile_context>

<pallas_src>
import functools

import jax
import jax.numpy as jnp
from jax.experimental import pallas as pl
from jax.experimental.pallas import tpu as pltpu  # noqa: F401


# ----------------------------------------------------------------------------
# Fused kernel: 2-layer LSTM (wavefront-fused) + Linear head, one invocation.
# Gate order matches PyTorch: [i, f, g, o].
# ----------------------------------------------------------------------------
def _fused_lstm_head_kernel(x_ref, wih1_ref, b1_ref, wbig_ref, b2_ref,
                            wfc_ref, bfc_ref, out_ref, *, B, T, H, P):
    f32 = jnp.float32
    bf16 = jnp.bfloat16

    def act(gates, c):
        # Full-width activations (2 EUP pushes over the whole 4H-lane vreg),
        # then lane-slice the results.
        sig = jax.nn.sigmoid(gates)
        th = jnp.tanh(gates)
        i = sig[:, 0 * H:1 * H]
        f = sig[:, 1 * H:2 * H]
        g = th[:, 2 * H:3 * H]
        o = sig[:, 3 * H:4 * H]
        c_new = f * c + i * g
        h_new = o * jnp.tanh(c_new)
        return h_new, c_new

    # Layer-1 input projection hoisted for all T timesteps (time-major rows:
    # row index = t*B + b) -> per-step use is a contiguous static slice.
    xp1 = jnp.dot(x_ref[...], wih1_ref[...],
                  preferred_element_type=f32) + b1_ref[...]          # (T*B, 4H)

    wbig = wbig_ref[...]                                             # (2H, 8H) bf16
    b2 = b2_ref[...]                                                 # (1, 4H)  f32

    h1 = jnp.zeros((B, H), f32)
    c1 = jnp.zeros((B, H), f32)
    h2 = jnp.zeros((B, H), f32)
    c2 = jnp.zeros((B, H), f32)
    h2_last = []

    # Wavefront-fused recurrence: step s does layer-1(time s) and
    # layer-2(time s-1) with one block-diagonal matmul.  Fully unrolled
    # (T static) for full LLO scheduler visibility.
    for s in range(T + 1):
        if s == 0:
            # h1 = h2 = 0 -> recurrent contribution vanishes; skip the matmul.
            h1, c1 = act(xp1[0:B, :], c1)
            continue
        comb = jnp.concatenate([h1, h2], axis=1).astype(bf16)        # (B, 2H)
        gall = jnp.dot(comb, wbig, preferred_element_type=f32)       # (B, 8H)
        if s < T:
            gates1 = gall[:, :4 * H] + xp1[s * B:(s + 1) * B, :]
            h1_new, c1 = act(gates1, c1)
        else:
            h1_new = h1
        # Layer-2 time (s-1): uses h1_{s-1} (pre-update h1) and h2_{s-2}.
        gates2 = gall[:, 4 * H:] + b2
        h2, c2 = act(gates2, c2)
        if (s - 1) >= T - P:
            h2_last.append(h2)
        h1 = h1_new

    # Batched linear head over the last P timesteps: one matmul, one store.
    hp = jnp.concatenate(h2_last, axis=0).astype(bf16)               # (P*B, H)
    y = jnp.dot(hp, wfc_ref[...], preferred_element_type=f32) + bfc_ref[...]
    out_ref[...] = y.astype(out_ref.dtype)                           # (P*B, C)


def _vmem_full(shape):
    """Whole-array VMEM block (grid-less call)."""
    shape = tuple(int(d) for d in shape)
    zeros = (0,) * len(shape)
    return pl.BlockSpec(shape, lambda: zeros)


# ----------------------------------------------------------------------------
# Parameter preparation (outside the jitted forward): transpose to (in, out),
# fuse the two bias vectors per layer, build the block-diagonal wavefront RHS,
# cast MXU operands to bf16 (biases stay f32).
# ----------------------------------------------------------------------------
def prepare_params(params):
    f32 = jnp.float32
    bf16 = jnp.bfloat16
    H = params["w_hh_l0"].shape[1]

    whh1 = jnp.transpose(params["w_hh_l0"]).astype(f32)              # (H, 4H)
    wih2 = jnp.transpose(params["w_ih_l1"]).astype(f32)              # (H, 4H)
    whh2 = jnp.transpose(params["w_hh_l1"]).astype(f32)              # (H, 4H)
    w_big = jnp.concatenate(
        [jnp.concatenate([whh1, wih2], axis=1),
         jnp.concatenate([jnp.zeros((H, 4 * H), f32), whh2], axis=1)],
        axis=0).astype(bf16)                                         # (2H, 8H)

    return {
        "wih1": jnp.transpose(params["w_ih_l0"]).astype(bf16),       # (Din, 4H)
        "b1": (params["b_ih_l0"] + params["b_hh_l0"]).reshape(1, -1).astype(f32),
        "w_big": w_big,
        "b2": (params["b_ih_l1"] + params["b_hh_l1"]).reshape(1, -1).astype(f32),
        "wfc": jnp.transpose(params["fc_w"]).astype(bf16),           # (H, C)
        "bfc": params["fc_b"].reshape(1, -1).astype(f32),            # (1, C)
    }


# ----------------------------------------------------------------------------
# Full model forward (matches Model.forward semantics).
# ----------------------------------------------------------------------------
def model_forward(prepped, x_enc, x_mark_enc=None, x_dec=None, x_mark_dec=None,
                  *, pred_len):
    B, T, Din = x_enc.shape
    H = prepped["w_big"].shape[0] // 2
    C = prepped["wfc"].shape[1]

    # Time-major rows (t*B + b), cast to bf16 for the MXU; one cheap wrapper
    # op, off the serial recurrence path.
    x_tm = jnp.transpose(x_enc, (1, 0, 2)).reshape(T * B, Din).astype(jnp.bfloat16)

    operands = (x_tm, prepped["wih1"], prepped["b1"], prepped["w_big"],
                prepped["b2"], prepped["wfc"], prepped["bfc"])

    kernel = functools.partial(_fused_lstm_head_kernel,
                               B=B, T=T, H=H, P=pred_len)
    y = pl.pallas_call(
        kernel,
        out_shape=jax.ShapeDtypeStruct((pred_len * B, C), jnp.float32),
        in_specs=[_vmem_full(op.shape) for op in operands],
        out_specs=_vmem_full((pred_len * B, C)),
    )(*operands)

    # (P*B, C) time-major -> (B, P, C); free wrapper-side reorder.
    return jnp.transpose(y.reshape(pred_len, B, C), (1, 0, 2))


# ----------------------------------------------------------------------------
# Pure-JAX f32 reference for verification.
# ----------------------------------------------------------------------------
def _ref_lstm_layer(x_btd, w_ih, w_hh, b_ih, b_hh):
    B, T, _ = x_btd.shape
    H = w_hh.shape[1]
    h = jnp.zeros((B, H), jnp.float32)
    c = jnp.zeros((B, H), jnp.float32)
    outs = []
    for t in range(T):
        gates = x_btd[:, t, :] @ w_ih.T + h @ w_hh.T + b_ih + b_hh
        i = jax.nn.sigmoid(gates[:, 0 * H:1 * H])
        f = jax.nn.sigmoid(gates[:, 1 * H:2 * H])
        g = jnp.tanh(gates[:, 2 * H:3 * H])
        o = jax.nn.sigmoid(gates[:, 3 * H:4 * H])
        c = f * c + i * g
        h = o * jnp.tanh(c)
        outs.append(h)
    return jnp.stack(outs, axis=1)


def _ref_forward(params, x_enc, pred_len):
    h1 = _ref_lstm_layer(x_enc, params["w_ih_l0"], params["w_hh_l0"],
                         params["b_ih_l0"], params["b_hh_l0"])
    h2 = _ref_lstm_layer(h1, params["w_ih_l1"], params["w_hh_l1"],
                         params["b_ih_l1"], params["b_hh_l1"])
    y = h2 @ params["fc_w"].T + params["fc_b"]
    return y[:, -pred_len:, :]


if __name__ == "__main__":
    # configs: enc_in=4, d_model=32, c_out=4, pred_len=4; batch=2, seq=8
    enc_in, d_model, c_out, pred_len = 4, 32, 4, 4
    B, T = 2, 8

    key = jax.random.PRNGKey(0)
    ks = jax.random.split(key, 16)
    k = 1.0 / jnp.sqrt(jnp.float32(d_model))

    def u(rk, shape):
        return jax.random.uniform(rk, shape, jnp.float32, -k, k)

    params = {
        "w_ih_l0": u(ks[0], (4 * d_model, enc_in)),
        "w_hh_l0": u(ks[1], (4 * d_model, d_model)),
        "b_ih_l0": u(ks[2], (4 * d_model,)),
        "b_hh_l0": u(ks[3], (4 * d_model,)),
        "w_ih_l1": u(ks[4], (4 * d_model, d_model)),
        "w_hh_l1": u(ks[5], (4 * d_model, d_model)),
        "b_ih_l1": u(ks[6], (4 * d_model,)),
        "b_hh_l1": u(ks[7], (4 * d_model,)),
        "fc_w":    u(ks[8], (c_out, d_model)),
        "fc_b":    u(ks[9], (c_out,)),
    }

    x_enc = jax.random.normal(ks[10], (B, T, enc_in), jnp.float32)
    x_mark_enc = jax.random.normal(ks[11], (B, T, 4), jnp.float32)   # unused
    x_dec = jax.random.normal(ks[12], (B, T, enc_in), jnp.float32)   # unused
    x_mark_dec = jax.random.normal(ks[13], (B, T, 4), jnp.float32)   # unused

    prepped = jax.tree_util.tree_map(jax.block_until_ready, prepare_params(params))

    fwd = jax.jit(functools.partial(model_forward, pred_len=pred_len))
    out = fwd(prepped, x_enc, x_mark_enc, x_dec, x_mark_dec)
    out = jax.block_until_ready(out)

    ref = _ref_forward(params, x_enc, pred_len)
    assert out.shape == (B, pred_len, c_out), out.shape
    # bf16 MXU operands (per perf review) -> not bit-identical to f32 PyTorch;
    # relaxed tolerance.
    assert jnp.allclose(out, ref, atol=2e-2, rtol=2e-2), "mismatch vs reference"

    print("KERNEL_OK")
</pallas_src>

<mosaic_0001>
module attributes {stable_mosaic.version = 11 : i64} {
  func.func @_fused_lstm_head_kernel(%arg0: memref<16x4xbf16, #tpu.memory_space<vmem>>, %arg1: memref<4x128xbf16, #tpu.memory_space<vmem>>, %arg2: memref<1x128xf32, #tpu.memory_space<vmem>>, %arg3: memref<64x256xbf16, #tpu.memory_space<vmem>>, %arg4: memref<1x128xf32, #tpu.memory_space<vmem>>, %arg5: memref<32x4xbf16, #tpu.memory_space<vmem>>, %arg6: memref<1x4xf32, #tpu.memory_space<vmem>>, %arg7: memref<8x4xf32, #tpu.memory_space<vmem>>) attributes {dimension_semantics = [], scalar_prefetch = 0 : i64, scratch_operands = 0 : i64, tpu.core_type = #tpu.core_type<tc>} {
    %c0 = arith.constant 0 : index
    %c0_0 = arith.constant 0 : index
    %0 = vector.load %arg0[%c0, %c0_0] : memref<16x4xbf16, #tpu.memory_space<vmem>>, vector<16x4xbf16>
    %c0_1 = arith.constant 0 : index
    %c0_2 = arith.constant 0 : index
    %1 = vector.load %arg1[%c0_1, %c0_2] : memref<4x128xbf16, #tpu.memory_space<vmem>>, vector<4x128xbf16>
    %cst = arith.constant dense<0.000000e+00> : vector<16x128xf32>
    %2 = tpu.matmul %0, %1, %cst {dimension_numbers = #tpu.dot_dimension_numbers<[1], [0], [0], [1], [0, 0, 1, 1], [], []>} : vector<16x4xbf16>, vector<4x128xbf16>, vector<16x128xf32> -> vector<16x128xf32>
    %c0_3 = arith.constant 0 : index
    %c0_4 = arith.constant 0 : index
    %3 = vector.load %arg2[%c0_3, %c0_4] : memref<1x128xf32, #tpu.memory_space<vmem>>, vector<1x128xf32>
    %4 = vector.broadcast %3 : vector<1x128xf32> to vector<16x128xf32>
    %5 = arith.addf %2, %4 : vector<16x128xf32>
    %c0_5 = arith.constant 0 : index
    %c0_6 = arith.constant 0 : index
    %6 = vector.load %arg3[%c0_5, %c0_6] : memref<64x256xbf16, #tpu.memory_space<vmem>>, vector<64x256xbf16>
    %c0_7 = arith.constant 0 : index
    %c0_8 = arith.constant 0 : index
    %7 = vector.load %arg4[%c0_7, %c0_8] : memref<1x128xf32, #tpu.memory_space<vmem>>, vector<1x128xf32>
    %cst_9 = arith.constant 0.000000e+00 : f32
    %8 = vector.broadcast %cst_9 : f32 to vector<2x32xf32>
    %cst_10 = arith.constant 0.000000e+00 : f32
    %9 = vector.broadcast %cst_10 : f32 to vector<2x32xf32>
    %cst_11 = arith.constant 0.000000e+00 : f32
    %10 = vector.broadcast %cst_11 : f32 to vector<2x32xf32>
    %11 = vector.extract_strided_slice %5 {offsets = [0, 0], sizes = [2, 128], strides = [1, 1]} : vector<16x128xf32> to vector<2x128xf32>
    %12 = arith.negf %11 : vector<2x128xf32>
    %13 = math.exp %12 : vector<2x128xf32>
    %cst_12 = arith.constant 1.000000e+00 : f32
    %14 = vector.broadcast %cst_12 : f32 to vector<2x128xf32>
    %15 = arith.addf %14, %13 : vector<2x128xf32>
    %16 = arith.divf %14, %15 : vector<2x128xf32>
    %17 = math.tanh %11 : vector<2x128xf32>
    %18 = vector.extract_strided_slice %16 {offsets = [0, 0], sizes = [2, 32], strides = [1, 1]} : vector<2x128xf32> to vector<2x32xf32>
    %19 = vector.extract_strided_slice %16 {offsets = [0, 32], sizes = [2, 32], strides = [1, 1]} : vector<2x128xf32> to vector<2x32xf32>
    %20 = vector.extract_strided_slice %17 {offsets = [0, 64], sizes = [2, 32], strides = [1, 1]} : vector<2x128xf32> to vector<2x32xf32>
    %21 = vector.extract_strided_slice %16 {offsets = [0, 96], sizes = [2, 32], strides = [1, 1]} : vector<2x128xf32> to vector<2x32xf32>
    %22 = arith.mulf %19, %8 : vector<2x32xf32>
    %23 = arith.mulf %18, %20 : vector<2x32xf32>
    %24 = arith.addf %22, %23 : vector<2x32xf32>
    %25 = math.tanh %24 : vector<2x32xf32>
    %26 = arith.mulf %21, %25 : vector<2x32xf32>
    %27 = tpu.concatenate %26, %9 in 1 : vector<2x32xf32>, vector<2x32xf32> -> vector<2x64xf32>
    %28 = arith.truncf %27 : vector<2x64xf32> to vector<2x64xbf16>
    %cst_13 = arith.constant dense<0.000000e+00> : vector<2x256xf32>
    %29 = tpu.matmul %28, %6, %cst_13 {dimension_numbers = #tpu.dot_dimension_numbers<[1], [0], [0], [1], [0, 0, 1, 1], [], []>} : vector<2x64xbf16>, vector<64x256xbf16>, vector<2x256xf32> -> vector<2x256xf32>
    %30 = vector.extract_strided_slice %29 {offsets = [0, 0], sizes = [2, 128], strides = [1, 1]} : vector<2x256xf32> to vector<2x128xf32>
    %31 = vector.extract_strided_slice %5 {offsets = [2, 0], sizes = [2, 128], strides = [1, 1]} : vector<16x128xf32> to vector<2x128xf32>
    %32 = arith.addf %30, %31 : vector<2x128xf32>
    %33 = arith.negf %32 : vector<2x128xf32>
    %34 = math.exp %33 : vector<2x128xf32>
    %cst_14 = arith.constant 1.000000e+00 : f32
    %35 = vector.broadcast %cst_14 : f32 to vector<2x128xf32>
    %36 = arith.addf %35, %34 : vector<2x128xf32>
    %37 = arith.divf %35, %36 : vector<2x128xf32>
    %38 = math.tanh %32 : vector<2x128xf32>
    %39 = vector.extract_strided_slice %37 {offsets = [0, 0], sizes = [2, 32], strides = [1, 1]} : vector<2x128xf32> to vector<2x32xf32>
    %40 = vector.extract_strided_slice %37 {offsets = [0, 32], sizes = [2, 32], strides = [1, 1]} : vector<2x128xf32> to vector<2x32xf32>
    %41 = vector.extract_strided_slice %38 {offsets = [0, 64], sizes = [2, 32], strides = [1, 1]} : vector<2x128xf32> to vector<2x32xf32>
    %42 = vector.extract_strided_slice %37 {offsets = [0, 96], sizes = [2, 32], strides = [1, 1]} : vector<2x128xf32> to vector<2x32xf32>
    %43 = arith.mulf %40, %24 : vector<2x32xf32>
    %44 = arith.mulf %39, %41 : vector<2x32xf32>
    %45 = arith.addf %43, %44 : vector<2x32xf32>
    %46 = math.tanh %45 : vector<2x32xf32>
    %47 = arith.mulf %42, %46 : vector<2x32xf32>
    %48 = vector.extract_strided_slice %29 {offsets = [0, 128], sizes = [2, 128], strides = [1, 1]} : vector<2x256xf32> to vector<2x128xf32>
    %49 = vector.broadcast %7 : vector<1x128xf32> to vector<2x128xf32>
    %50 = arith.addf %48, %49 : vector<2x128xf32>
    %51 = arith.negf %50 : vector<2x128xf32>
    %52 = math.exp %51 : vector<2x128xf32>
    %cst_15 = arith.constant 1.000000e+00 : f32
    %53 = vector.broadcast %cst_15 : f32 to vector<2x128xf32>
    %54 = arith.addf %53, %52 : vector<2x128xf32>
    %55 = arith.divf %53, %54 : vector<2x128xf32>
    %56 = math.tanh %50 : vector<2x128xf32>
    %57 = vector.extract_strided_slice %55 {offsets = [0, 0], sizes = [2, 32], strides = [1, 1]} : vector<2x128xf32> to vector<2x32xf32>
    %58 = vector.extract_strided_slice %55 {offsets = [0, 32], sizes = [2, 32], strides = [1, 1]} : vector<2x128xf32> to vector<2x32xf32>
    %59 = vector.extract_strided_slice %56 {offsets = [0, 64], sizes = [2, 32], strides = [1, 1]} : vector<2x128xf32> to vector<2x32xf32>
    %60 = vector.extract_strided_slice %55 {offsets = [0, 96], sizes = [2, 32], strides = [1, 1]} : vector<2x128xf32> to vector<2x32xf32>
    %61 = arith.mulf %58, %10 : vector<2x32xf32>
    %62 = arith.mulf %57, %59 : vector<2x32xf32>
    %63 = arith.addf %61, %62 : vector<2x32xf32>
    %64 = math.tanh %63 : vector<2x32xf32>
    %65 = arith.mulf %60, %64 : vector<2x32xf32>
    %66 = tpu.concatenate %47, %65 in 1 : vector<2x32xf32>, vector<2x32xf32> -> vector<2x64xf32>
    %67 = arith.truncf %66 : vector<2x64xf32> to vector<2x64xbf16>
    %cst_16 = arith.constant dense<0.000000e+00> : vector<2x256xf32>
    %68 = tpu.matmul %67, %6, %cst_16 {dimension_numbers = #tpu.dot_dimension_numbers<[1], [0], [0], [1], [0, 0, 1, 1], [], []>} : vector<2x64xbf16>, vector<64x256xbf16>, vector<2x256xf32> -> vector<2x256xf32>
    %69 = vector.extract_strided_slice %68 {offsets = [0, 0], sizes = [2, 128], strides = [1, 1]} : vector<2x256xf32> to vector<2x128xf32>
    %70 = vector.extract_strided_slice %5 {offsets = [4, 0], sizes = [2, 128], strides = [1, 1]} : vector<16x128xf32> to vector<2x128xf32>
    %71 = arith.addf %69, %70 : vector<2x128xf32>
    %72 = arith.negf %71 : vector<2x128xf32>
    %73 = math.exp %72 : vector<2x128xf32>
    %cst_17 = arith.constant 1.000000e+00 : f32
    %74 = vector.broadcast %cst_17 : f32 to vector<2x128xf32>
    %75 = arith.addf %74, %73 : vector<2x128xf32>
    %76 = arith.divf %74, %75 : vector<2x128xf32>
    %77 = math.tanh %71 : vector<2x128xf32>
    %78 = vector.extract_strided_slice %76 {offsets = [0, 0], sizes = [2, 32], strides = [1, 1]} : vector<2x128xf32> to vector<2x32xf32>
    %79 = vector.extract_strided_slice %76 {offsets = [0, 32], sizes = [2, 32], strides = [1, 1]} : vector<2x128xf32> to vector<2x32xf32>
    %80 = vector.extract_strided_slice %77 {offsets = [0, 64], sizes = [2, 32], strides = [1, 1]} : vector<2x128xf32> to vector<2x32xf32>
    %81 = vector.extract_strided_slice %76 {offsets = [0, 96], sizes = [2, 32], strides = [1, 1]} : vector<2x128xf32> to vector<2x32xf32>
    %82 = arith.mulf %79, %45 : vector<2x32xf32>
    %83 = arith.mulf %78, %80 : vector<2x32xf32>
    %84 = arith.addf %82, %83 : vector<2x32xf32>
    %85 = math.tanh %84 : vector<2x32xf32>
    %86 = arith.mulf %81, %85 : vector<2x32xf32>
    %87 = vector.extract_strided_slice %68 {offsets = [0, 128], sizes = [2, 128], strides = [1, 1]} : vector<2x256xf32> to vector<2x128xf32>
    %88 = vector.broadcast %7 : vector<1x128xf32> to vector<2x128xf32>
    %89 = arith.addf %87, %88 : vector<2x128xf32>
    %90 = arith.negf %89 : vector<2x128xf32>
    %91 = math.exp %90 : vector<2x128xf32>
    %cst_18 = arith.constant 1.000000e+00 : f32
    %92 = vector.broadcast %cst_18 : f32 to vector<2x128xf32>
    %93 = arith.addf %92, %91 : vector<2x128xf32>
    %94 = arith.divf %92, %93 : vector<2x128xf32>
    %95 = math.tanh %89 : vector<2x128xf32>
    %96 = vector.extract_strided_slice %94 {offsets = [0, 0], sizes = [2, 32], strides = [1, 1]} : vector<2x128xf32> to vector<2x32xf32>
    %97 = vector.extract_strided_slice %94 {offsets = [0, 32], sizes = [2, 32], strides = [1, 1]} : vector<2x128xf32> to vector<2x32xf32>
    %98 = vector.extract_strided_slice %95 {offsets = [0, 64], sizes = [2, 32], strides = [1, 1]} : vector<2x128xf32> to vector<2x32xf32>
    %99 = vector.extract_strided_slice %94 {offsets = [0, 96], sizes = [2, 32], strides = [1, 1]} : vector<2x128xf32> to vector<2x32xf32>
    %100 = arith.mulf %97, %63 : vector<2x32xf32>
    %101 = arith.mulf %96, %98 : vector<2x32xf32>
    %102 = arith.addf %100, %101 : vector<2x32xf32>
    %103 = math.tanh %102 : vector<2x32xf32>
    %104 = arith.mulf %99, %103 : vector<2x32xf32>
    %105 = tpu.concatenate %86, %104 in 1 : vector<2x32xf32>, vector<2x32xf32> -> vector<2x64xf32>
    %106 = arith.truncf %105 : vector<2x64xf32> to vector<2x64xbf16>
    %cst_19 = arith.constant dense<0.000000e+00> : vector<2x256xf32>
    %107 = tpu.matmul %106, %6, %cst_19 {dimension_numbers = #tpu.dot_dimension_numbers<[1], [0], [0], [1], [0, 0, 1, 1], [], []>} : vector<2x64xbf16>, vector<64x256xbf16>, vector<2x256xf32> -> vector<2x256xf32>
    %108 = vector.extract_strided_slice %107 {offsets = [0, 0], sizes = [2, 128], strides = [1, 1]} : vector<2x256xf32> to vector<2x128xf32>
    %109 = vector.extract_strided_slice %5 {offsets = [6, 0], sizes = [2, 128], strides = [1, 1]} : vector<16x128xf32> to vector<2x128xf32>
    %110 = arith.addf %108, %109 : vector<2x128xf32>
    %111 = arith.negf %110 : vector<2x128xf32>
    %112 = math.exp %111 : vector<2x128xf32>
    %cst_20 = arith.constant 1.000000e+00 : f32
    %113 = vector.broadcast %cst_20 : f32 to vector<2x128xf32>
    %114 = arith.addf %113, %112 : vector<2x128xf32>
    %115 = arith.divf %113, %114 : vector<2x128xf32>
    %116 = math.tanh %110 : vector<2x128xf32>
    %117 = vector.extract_strided_slice %115 {offsets = [0, 0], sizes = [2, 32], strides = [1, 1]} : vector<2x128xf32> to vector<2x32xf32>
    %118 = vector.extract_strided_slice %115 {offsets = [0, 32], sizes = [2, 32], strides = [1, 1]} : vector<2x128xf32> to vector<2x32xf32>
    %119 = vector.extract_strided_slice %116 {offsets = [0, 64], sizes = [2, 32], strides = [1, 1]} : vector<2x128xf32> to vector<2x32xf32>
    %120 = vector.extract_strided_slice %115 {offsets = [0, 96], sizes = [2, 32], strides = [1, 1]} : vector<2x128xf32> to vector<2x32xf32>
    %121 = arith.mulf %118, %84 : vector<2x32xf32>
    %122 = arith.mulf %117, %119 : vector<2x32xf32>
    %123 = arith.addf %121, %122 : vector<2x32xf32>
    %124 = math.tanh %123 : vector<2x32xf32>
    %125 = arith.mulf %120, %124 : vector<2x32xf32>
    %126 = vector.extract_strided_slice %107 {offsets = [0, 128], sizes = [2, 128], strides = [1, 1]} : vector<2x256xf32> to vector<2x128xf32>
    %127 = vector.broadcast %7 : vector<1x128xf32> to vector<2x128xf32>
    %128 = arith.addf %126, %127 : vector<2x128xf32>
    %129 = arith.negf %128 : vector<2x128xf32>
    %130 = math.exp %129 : vector<2x128xf32>
    %cst_21 = arith.constant 1.000000e+00 : f32
    %131 = vector.broadcast %cst_21 : f32 to vector<2x128xf32>
    %132 = arith.addf %131, %130 : vector<2x128xf32>
    %133 = arith.divf %131, %132 : vector<2x128xf32>
    %134 = math.tanh %128 : vector<2x128xf32>
    %135 = vector.extract_strided_slice %133 {offsets = [0, 0], sizes = [2, 32], strides = [1, 1]} : vector<2x128xf32> to vector<2x32xf32>
    %136 = vector.extract_strided_slice %133 {offsets = [0, 32], sizes = [2, 32], strides = [1, 1]} : vector<2x128xf32> to vector<2x32xf32>
    %137 = vector.extract_strided_slice %134 {offsets = [0, 64], sizes = [2, 32], strides = [1, 1]} : vector<2x128xf32> to vector<2x32xf32>
    %138 = vector.extract_strided_slice %133 {offsets = [0, 96], sizes = [2, 32], strides = [1, 1]} : vector<2x128xf32> to vector<2x32xf32>
    %139 = arith.mulf %136, %102 : vector<2x32xf32>
    %140 = arith.mulf %135, %137 : vector<2x32xf32>
    %141 = arith.addf %139, %140 : vector<2x32xf32>
    %142 = math.tanh %141 : vector<2x32xf32>
    %143 = arith.mulf %138, %142 : vector<2x32xf32>
    %144 = tpu.concatenate %125, %143 in 1 : vector<2x32xf32>, vector<2x32xf32> -> vector<2x64xf32>
    %145 = arith.truncf %144 : vector<2x64xf32> to vector<2x64xbf16>
    %cst_22 = arith.constant dense<0.000000e+00> : vector<2x256xf32>
    %146 = tpu.matmul %145, %6, %cst_22 {dimension_numbers = #tpu.dot_dimension_numbers<[1], [0], [0], [1], [0, 0, 1, 1], [], []>} : vector<2x64xbf16>, vector<64x256xbf16>, vector<2x256xf32> -> vector<2x256xf32>
    %147 = vector.extract_strided_slice %146 {offsets = [0, 0], sizes = [2, 128], strides = [1, 1]} : vector<2x256xf32> to vector<2x128xf32>
    %148 = vector.extract_strided_slice %5 {offsets = [8, 0], sizes = [2, 128], strides = [1, 1]} : vector<16x128xf32> to vector<2x128xf32>
    %149 = arith.addf %147, %148 : vector<2x128xf32>
    %150 = arith.negf %149 : vector<2x128xf32>
    %151 = math.exp %150 : vector<2x128xf32>
    %cst_23 = arith.constant 1.000000e+00 : f32
    %152 = vector.broadcast %cst_23 : f32 to vector<2x128xf32>
    %153 = arith.addf %152, %151 : vector<2x128xf32>
    %154 = arith.divf %152, %153 : vector<2x128xf32>
    %155 = math.tanh %149 : vector<2x128xf32>
    %156 = vector.extract_strided_slice %154 {offsets = [0, 0], sizes = [2, 32], strides = [1, 1]} : vector<2x128xf32> to vector<2x32xf32>
    %157 = vector.extract_strided_slice %154 {offsets = [0, 32], sizes = [2, 32], strides = [1, 1]} : vector<2x128xf32> to vector<2x32xf32>
    %158 = vector.extract_strided_slice %155 {offsets = [0, 64], sizes = [2, 32], strides = [1, 1]} : vector<2x128xf32> to vector<2x32xf32>
    %159 = vector.extract_strided_slice %154 {offsets = [0, 96], sizes = [2, 32], strides = [1, 1]} : vector<2x128xf32> to vector<2x32xf32>
    %160 = arith.mulf %157, %123 : vector<2x32xf32>
    %161 = arith.mulf %156, %158 : vector<2x32xf32>
    %162 = arith.addf %160, %161 : vector<2x32xf32>
    %163 = math.tanh %162 : vector<2x32xf32>
    %164 = arith.mulf %159, %163 : vector<2x32xf32>
    %165 = vector.extract_strided_slice %146 {offsets = [0, 128], sizes = [2, 128], strides = [1, 1]} : vector<2x256xf32> to vector<2x128xf32>
    %166 = vector.broadcast %7 : vector<1x128xf32> to vector<2x128xf32>
    %167 = arith.addf %165, %166 : vector<2x128xf32>
    %168 = arith.negf %167 : vector<2x128xf32>
    %169 = math.exp %168 : vector<2x128xf32>
    %cst_24 = arith.constant 1.000000e+00 : f32
    %170 = vector.broadcast %cst_24 : f32 to vector<2x128xf32>
    %171 = arith.addf %170, %169 : vector<2x128xf32>
    %172 = arith.divf %170, %171 : vector<2x128xf32>
    %173 = math.tanh %167 : vector<2x128xf32>
    %174 = vector.extract_strided_slice %172 {offsets = [0, 0], sizes = [2, 32], strides = [1, 1]} : vector<2x128xf32> to vector<2x32xf32>
    %175 = vector.extract_strided_slice %172 {offsets = [0, 32], sizes = [2, 32], strides = [1, 1]} : vector<2x128xf32> to vector<2x32xf32>
    %176 = vector.extract_strided_slice %173 {offsets = [0, 64], sizes = [2, 32], strides = [1, 1]} : vector<2x128xf32> to vector<2x32xf32>
    %177 = vector.extract_strided_slice %172 {offsets = [0, 96], sizes = [2, 32], strides = [1, 1]} : vector<2x128xf32> to vector<2x32xf32>
    %178 = arith.mulf %175, %141 : vector<2x32xf32>
    %179 = arith.mulf %174, %176 : vector<2x32xf32>
    %180 = arith.addf %178, %179 : vector<2x32xf32>
    %181 = math.tanh %180 : vector<2x32xf32>
    %182 = arith.mulf %177, %181 : vector<2x32xf32>
    %183 = tpu.concatenate %164, %182 in 1 : vector<2x32xf32>, vector<2x32xf32> -> vector<2x64xf32>
    %184 = arith.truncf %183 : vector<2x64xf32> to vector<2x64xbf16>
    %cst_25 = arith.constant dense<0.000000e+00> : vector<2x256xf32>
    %185 = tpu.matmul %184, %6, %cst_25 {dimension_numbers = #tpu.dot_dimension_numbers<[1], [0], [0], [1], [0, 0, 1, 1], [], []>} : vector<2x64xbf16>, vector<64x256xbf16>, vector<2x256xf32> -> vector<2x256xf32>
    %186 = vector.extract_strided_slice %185 {offsets = [0, 0], sizes = [2, 128], strides = [1, 1]} : vector<2x256xf32> to vector<2x128xf32>
    %187 = vector.extract_strided_slice %5 {offsets = [10, 0], sizes = [2, 128], strides = [1, 1]} : vector<16x128xf32> to vector<2x128xf32>
    %188 = arith.addf %186, %187 : vector<2x128xf32>
    %189 = arith.negf %188 : vector<2x128xf32>
    %190 = math.exp %189 : vector<2x128xf32>
    %cst_26 = arith.constant 1.000000e+00 : f32
    %191 = vector.broadcast %cst_26 : f32 to vector<2x128xf32>
    %192 = arith.addf %191, %190 : vector<2x128xf32>
    %193 = arith.divf %191, %192 : vector<2x128xf32>
    %194 = math.tanh %188 : vector<2x128xf32>
    %195 = vector.extract_strided_slice %193 {offsets = [0, 0], sizes = [2, 32], strides = [1, 1]} : vector<2x128xf32> to vector<2x32xf32>
    %196 = vector.extract_strided_slice %193 {offsets = [0, 32], sizes = [2, 32], strides = [1, 1]} : vector<2x128xf32> to vector<2x32xf32>
    %197 = vector.extract_strided_slice %194 {offsets = [0, 64], sizes = [2, 32], strides = [1, 1]} : vector<2x128xf32> to vector<2x32xf32>
    %198 = vector.extract_strided_slice %193 {offsets = [0, 96], sizes = [2, 32], strides = [1, 1]} : vector<2x128xf32> to vector<2x32xf32>
    %199 = arith.mulf %196, %162 : vector<2x32xf32>
    %200 = arith.mulf %195, %197 : vector<2x32xf32>
    %201 = arith.addf %199, %200 : vector<2x32xf32>
    %202 = math.tanh %201 : vector<2x32xf32>
    %203 = arith.mulf %198, %202 : vector<2x32xf32>
    %204 = vector.extract_strided_slice %185 {offsets = [0, 128], sizes = [2, 128], strides = [1, 1]} : vector<2x256xf32> to vector<2x128xf32>
    %205 = vector.broadcast %7 : vector<1x128xf32> to vector<2x128xf32>
    %206 = arith.addf %204, %205 : vector<2x128xf32>
    %207 = arith.negf %206 : vector<2x128xf32>
    %208 = math.exp %207 : vector<2x128xf32>
    %cst_27 = arith.constant 1.000000e+00 : f32
    %209 = vector.broadcast %cst_27 : f32 to vector<2x128xf32>
    %210 = arith.addf %209, %208 : vector<2x128xf32>
    %211 = arith.divf %209, %210 : vector<2x128xf32>
    %212 = math.tanh %206 : vector<2x128xf32>
    %213 = vector.extract_strided_slice %211 {offsets = [0, 0], sizes = [2, 32], strides = [1, 1]} : vector<2x128xf32> to vector<2x32xf32>
    %214 = vector.extract_strided_slice %211 {offsets = [0, 32], sizes = [2, 32], strides = [1, 1]} : vector<2x128xf32> to vector<2x32xf32>
    %215 = vector.extract_strided_slice %212 {offsets = [0, 64], sizes = [2, 32], strides = [1, 1]} : vector<2x128xf32> to vector<2x32xf32>
    %216 = vector.extract_strided_slice %211 {offsets = [0, 96], sizes = [2, 32], strides = [1, 1]} : vector<2x128xf32> to vector<2x32xf32>
    %217 = arith.mulf %214, %180 : vector<2x32xf32>
    %218 = arith.mulf %213, %215 : vector<2x32xf32>
    %219 = arith.addf %217, %218 : vector<2x32xf32>
    %220 = math.tanh %219 : vector<2x32xf32>
    %221 = arith.mulf %216, %220 : vector<2x32xf32>
    %222 = tpu.concatenate %203, %221 in 1 : vector<2x32xf32>, vector<2x32xf32> -> vector<2x64xf32>
    %223 = arith.truncf %222 : vector<2x64xf32> to vector<2x64xbf16>
    %cst_28 = arith.constant dense<0.000000e+00> : vector<2x256xf32>
    %224 = tpu.matmul %223, %6, %cst_28 {dimension_numbers = #tpu.dot_dimension_numbers<[1], [0], [0], [1], [0, 0, 1, 1], [], []>} : vector<2x64xbf16>, vector<64x256xbf16>, vector<2x256xf32> -> vector<2x256xf32>
    %225 = vector.extract_strided_slice %224 {offsets = [0, 0], sizes = [2, 128], strides = [1, 1]} : vector<2x256xf32> to vector<2x128xf32>
    %226 = vector.extract_strided_slice %5 {offsets = [12, 0], sizes = [2, 128], strides = [1, 1]} : vector<16x128xf32> to vector<2x128xf32>
    %227 = arith.addf %225, %226 : vector<2x128xf32>
    %228 = arith.negf %227 : vector<2x128xf32>
    %229 = math.exp %228 : vector<2x128xf32>
    %cst_29 = arith.constant 1.000000e+00 : f32
    %230 = vector.broadcast %cst_29 : f32 to vector<2x128xf32>
    %231 = arith.addf %230, %229 : vector<2x128xf32>
    %232 = arith.divf %230, %231 : vector<2x128xf32>
    %233 = math.tanh %227 : vector<2x128xf32>
    %234 = vector.extract_strided_slice %232 {offsets = [0, 0], sizes = [2, 32], strides = [1, 1]} : vector<2x128xf32> to vector<2x32xf32>
    %235 = vector.extract_strided_slice %232 {offsets = [0, 32], sizes = [2, 32], strides = [1, 1]} : vector<2x128xf32> to vector<2x32xf32>
    %236 = vector.extract_strided_slice %233 {offsets = [0, 64], sizes = [2, 32], strides = [1, 1]} : vector<2x128xf32> to vector<2x32xf32>
    %237 = vector.extract_strided_slice %232 {offsets = [0, 96], sizes = [2, 32], strides = [1, 1]} : vector<2x128xf32> to vector<2x32xf32>
    %238 = arith.mulf %235, %201 : vector<2x32xf32>
    %239 = arith.mulf %234, %236 : vector<2x32xf32>
    %240 = arith.addf %238, %239 : vector<2x32xf32>
    %241 = math.tanh %240 : vector<2x32xf32>
    %242 = arith.mulf %237, %241 : vector<2x32xf32>
    %243 = vector.extract_strided_slice %224 {offsets = [0, 128], sizes = [2, 128], strides = [1, 1]} : vector<2x256xf32> to vector<2x128xf32>
    %244 = vector.broadcast %7 : vector<1x128xf32> to vector<2x128xf32>
    %245 = arith.addf %243, %244 : vector<2x128xf32>
    %246 = arith.negf %245 : vector<2x128xf32>
    %247 = math.exp %246 : vector<2x128xf32>
    %cst_30 = arith.constant 1.000000e+00 : f32
    %248 = vector.broadcast %cst_30 : f32 to vector<2x128xf32>
    %249 = arith.addf %248, %247 : vector<2x128xf32>
    %250 = arith.divf %248, %249 : vector<2x128xf32>
    %251 = math.tanh %245 : vector<2x128xf32>
    %252 = vector.extract_strided_slice %250 {offsets = [0, 0], sizes = [2, 32], strides = [1, 1]} : vector<2x128xf32> to vector<2x32xf32>
    %253 = vector.extract_strided_slice %250 {offsets = [0, 32], sizes = [2, 32], strides = [1, 1]} : vector<2x128xf32> to vector<2x32xf32>
    %254 = vector.extract_strided_slice %251 {offsets = [0, 64], sizes = [2, 32], strides = [1, 1]} : vector<2x128xf32> to vector<2x32xf32>
    %255 = vector.extract_strided_slice %250 {offsets = [0, 96], sizes = [2, 32], strides = [1, 1]} : vector<2x128xf32> to vector<2x32xf32>
    %256 = arith.mulf %253, %219 : vector<2x32xf32>
    %257 = arith.mulf %252, %254 : vector<2x32xf32>
    %258 = arith.addf %256, %257 : vector<2x32xf32>
    %259 = math.tanh %258 : vector<2x32xf32>
    %260 = arith.mulf %255, %259 : vector<2x32xf32>
    %261 = tpu.concatenate %242, %260 in 1 : vector<2x32xf32>, vector<2x32xf32> -> vector<2x64xf32>
    %262 = arith.truncf %261 : vector<2x64xf32> to vector<2x64xbf16>
    %cst_31 = arith.constant dense<0.000000e+00> : vector<2x256xf32>
    %263 = tpu.matmul %262, %6, %cst_31 {dimension_numbers = #tpu.dot_dimension_numbers<[1], [0], [0], [1], [0, 0, 1, 1], [], []>} : vector<2x64xbf16>, vector<64x256xbf16>, vector<2x256xf32> -> vector<2x256xf32>
    %264 = vector.extract_strided_slice %263 {offsets = [0, 0], sizes = [2, 128], strides = [1, 1]} : vector<2x256xf32> to vector<2x128xf32>
    %265 = vector.extract_strided_slice %5 {offsets = [14, 0], sizes = [2, 128], strides = [1, 1]} : vector<16x128xf32> to vector<2x128xf32>
    %266 = arith.addf %264, %265 : vector<2x128xf32>
    %267 = arith.negf %266 : vector<2x128xf32>
    %268 = math.exp %267 : vector<2x128xf32>
    %cst_32 = arith.constant 1.000000e+00 : f32
    %269 = vector.broadcast %cst_32 : f32 to vector<2x128xf32>
    %270 = arith.addf %269, %268 : vector<2x128xf32>
    %271 = arith.divf %269, %270 : vector<2x128xf32>
    %272 = math.tanh %266 : vector<2x128xf32>
    %273 = vector.extract_strided_slice %271 {offsets = [0, 0], sizes = [2, 32], strides = [1, 1]} : vector<2x128xf32> to vector<2x32xf32>
    %274 = vector.extract_strided_slice %271 {offsets = [0, 32], sizes = [2, 32], strides = [1, 1]} : vector<2x128xf32> to vector<2x32xf32>
    %275 = vector.extract_strided_slice %272 {offsets = [0, 64], sizes = [2, 32], strides = [1, 1]} : vector<2x128xf32> to vector<2x32xf32>
    %276 = vector.extract_strided_slice %271 {offsets = [0, 96], sizes = [2, 32], strides = [1, 1]} : vector<2x128xf32> to vector<2x32xf32>
    %277 = arith.mulf %274, %240 : vector<2x32xf32>
    %278 = arith.mulf %273, %275 : vector<2x32xf32>
    %279 = arith.addf %277, %278 : vector<2x32xf32>
    %280 = math.tanh %279 : vector<2x32xf32>
    %281 = arith.mulf %276, %280 : vector<2x32xf32>
    %282 = vector.extract_strided_slice %263 {offsets = [0, 128], sizes = [2, 128], strides = [1, 1]} : vector<2x256xf32> to vector<2x128xf32>
    %283 = vector.broadcast %7 : vector<1x128xf32> to vector<2x128xf32>
    %284 = arith.addf %282, %283 : vector<2x128xf32>
    %285 = arith.negf %284 : vector<2x128xf32>
    %286 = math.exp %285 : vector<2x128xf32>
    %cst_33 = arith.constant 1.000000e+00 : f32
    %287 = vector.broadcast %cst_33 : f32 to vector<2x128xf32>
    %288 = arith.addf %287, %286 : vector<2x128xf32>
    %289 = arith.divf %287, %288 : vector<2x128xf32>
    %290 = math.tanh %284 : vector<2x128xf32>
    %291 = vector.extract_strided_slice %289 {offsets = [0, 0], sizes = [2, 32], strides = [1, 1]} : vector<2x128xf32> to vector<2x32xf32>
    %292 = vector.extract_strided_slice %289 {offsets = [0, 32], sizes = [2, 32], strides = [1, 1]} : vector<2x128xf32> to vector<2x32xf32>
    %293 = vector.extract_strided_slice %290 {offsets = [0, 64], sizes = [2, 32], strides = [1, 1]} : vector<2x128xf32> to vector<2x32xf32>
    %294 = vector.extract_strided_slice %289 {offsets = [0, 96], sizes = [2, 32], strides = [1, 1]} : vector<2x128xf32> to vector<2x32xf32>
    %295 = arith.mulf %292, %258 : vector<2x32xf32>
    %296 = arith.mulf %291, %293 : vector<2x32xf32>
    %297 = arith.addf %295, %296 : vector<2x32xf32>
    %298 = math.tanh %297 : vector<2x32xf32>
    %299 = arith.mulf %294, %298 : vector<2x32xf32>
    %300 = tpu.concatenate %281, %299 in 1 : vector<2x32xf32>, vector<2x32xf32> -> vector<2x64xf32>
    %301 = arith.truncf %300 : vector<2x64xf32> to vector<2x64xbf16>
    %cst_34 = arith.constant dense<0.000000e+00> : vector<2x256xf32>
    %302 = tpu.matmul %301, %6, %cst_34 {dimension_numbers = #tpu.dot_dimension_numbers<[1], [0], [0], [1], [0, 0, 1, 1], [], []>} : vector<2x64xbf16>, vector<64x256xbf16>, vector<2x256xf32> -> vector<2x256xf32>
    %303 = vector.extract_strided_slice %302 {offsets = [0, 128], sizes = [2, 128], strides = [1, 1]} : vector<2x256xf32> to vector<2x128xf32>
    %304 = vector.broadcast %7 : vector<1x128xf32> to vector<2x128xf32>
    %305 = arith.addf %303, %304 : vector<2x128xf32>
    %306 = arith.negf %305 : vector<2x128xf32>
    %307 = math.exp %306 : vector<2x128xf32>
    %cst_35 = arith.constant 1.000000e+00 : f32
    %308 = vector.broadcast %cst_35 : f32 to vector<2x128xf32>
    %309 = arith.addf %308, %307 : vector<2x128xf32>
    %310 = arith.divf %308, %309 : vector<2x128xf32>
    %311 = math.tanh %305 : vector<2x128xf32>
    %312 = vector.extract_strided_slice %310 {offsets = [0, 0], sizes = [2, 32], strides = [1, 1]} : vector<2x128xf32> to vector<2x32xf32>
    %313 = vector.extract_strided_slice %310 {offsets = [0, 32], sizes = [2, 32], strides = [1, 1]} : vector<2x128xf32> to vector<2x32xf32>
    %314 = vector.extract_strided_slice %311 {offsets = [0, 64], sizes = [2, 32], strides = [1, 1]} : vector<2x128xf32> to vector<2x32xf32>
    %315 = vector.extract_strided_slice %310 {offsets = [0, 96], sizes = [2, 32], strides = [1, 1]} : vector<2x128xf32> to vector<2x32xf32>
    %316 = arith.mulf %313, %297 : vector<2x32xf32>
    %317 = arith.mulf %312, %314 : vector<2x32xf32>
    %318 = arith.addf %316, %317 : vector<2x32xf32>
    %319 = math.tanh %318 : vector<2x32xf32>
    %320 = arith.mulf %315, %319 : vector<2x32xf32>
    %321 = tpu.concatenate %221, %260, %299, %320 in 0 : vector<2x32xf32>, vector<2x32xf32>, vector<2x32xf32>, vector<2x32xf32> -> vector<8x32xf32>
    %322 = arith.truncf %321 : vector<8x32xf32> to vector<8x32xbf16>
    %c0_36 = arith.constant 0 : index
    %c0_37 = arith.constant 0 : index
    %323 = vector.load %arg5[%c0_36, %c0_37] : memref<32x4xbf16, #tpu.memory_space<vmem>>, vector<32x4xbf16>
    %cst_38 = arith.constant dense<0.000000e+00> : vector<8x4xf32>
    %324 = tpu.matmul %322, %323, %cst_38 {dimension_numbers = #tpu.dot_dimension_numbers<[1], [0], [0], [1], [0, 0, 1, 1], [], []>} : vector<8x32xbf16>, vector<32x4xbf16>, vector<8x4xf32> -> vector<8x4xf32>
    %c0_39 = arith.constant 0 : index
    %c0_40 = arith.constant 0 : index
    %325 = vector.load %arg6[%c0_39, %c0_40] : memref<1x4xf32, #tpu.memory_space<vmem>>, vector<1x4xf32>
    %326 = vector.broadcast %325 : vector<1x4xf32> to vector<8x4xf32>
    %327 = arith.addf %324, %326 : vector<8x4xf32>
    %c0_41 = arith.constant 0 : index
    %c0_42 = arith.constant 0 : index
    %328 = vector.load %arg7[%c0_41, %c0_42] : memref<8x4xf32, #tpu.memory_space<vmem>>, vector<8x4xf32>
    tpu.vector_store %arg7[%c0_41, %c0_42], %327 {strides = array<i32>} : memref<8x4xf32, #tpu.memory_space<vmem>>, vector<8x4xf32>,
    return
  }
}

</mosaic_0001>

<llo_original>
// kernel: model_forward.1
$region0: #{model_forward.1}
  #allocation0 [shape = 'u32[]', space=smem, size = 0x4, offset = 0x4, fixed_abs, tag = 'smem constant byte address 0x4 - core index']
  #allocation1 [shape = 'u32[72,128]{1,0:T(1,128)}', space=vmem, size = 0x9000, scoped, tag = 'internal scratch']
  %s0 = inlined_call_operand.vmem [shape: bf16[16,4], index: 0, kind: input, shape index: {}]
  %s1 = inlined_call_operand.vmem [shape: bf16[4,128], index: 1, kind: input, shape index: {}]
  %s2 = inlined_call_operand.vmem [shape: f32[1,128], index: 2, kind: input, shape index: {}]
  %s3 = inlined_call_operand.hbm [shape: bf16[64,256], index: 3, kind: input, shape index: {}]
  %s4 = inlined_call_operand.vmem [shape: f32[1,128], index: 4, kind: input, shape index: {}]
  %s5 = inlined_call_operand.vmem [shape: bf16[32,4], index: 5, kind: input, shape index: {}]
  %s6 = inlined_call_operand.vmem [shape: f32[1,4], index: 6, kind: input, shape index: {}]
  %s7 = inlined_call_operand.vmem [shape: f32[8,4], index: 7, kind: output, shape index: {}]
  %s8 = sld [smem:[#allocation0]]
  $region42: #{model_forward.1} parent=0
    _
  %s10 = ssub.s32 1, %s8
  %s11 = scalar_select 0, %s10, %s8
  $region1: #{model_forward.1} parent=0
    #allocation2 [shape = 'u8[32768]{0}', space=vmem, size = 0x8000, scoped, tag = 'input window, operand 3, single buffered']
    #allocation3 [shape = 's32[1]{0}', space=sflag, size = 0x4, scoped, tag = 'scoped memory for model_forward.1']
    %12 = vsyncpa [#allocation3], 0
    // Predicated region
    $region2: #{model_forward.1} parent=1 // pred_check
      _
    $region3: #{model_forward.1} parent=1 // pred_check_branch
      %14 = sbr.rel (0) target = $region5
    $region4: #{model_forward.1} parent=1 // pred_region
      _
    $region5: #{model_forward.1} parent=1 // pred_fallthru
      _
    // Predicated region
    $region6: #{model_forward.1} parent=1 // pred_check
      _
    $region7: #{model_forward.1} parent=1 // pred_check_branch
      %16 = sbr.rel (0) target = $region9
    $region8: #{model_forward.1} parent=1 // pred_region
      _
    $region9: #{model_forward.1} parent=1 // pred_fallthru
      _
    // Predicated region
    $region10: #{model_forward.1} parent=1 // pred_check
      _
    $region11: #{model_forward.1} parent=1 // pred_check_branch
      %18 = sbr.rel (0) target = $region13
    $region12: #{model_forward.1} parent=1 // pred_region
      _
    $region13: #{model_forward.1} parent=1 // pred_fallthru
      _
    // Predicated region
    $region14: #{model_forward.1} parent=1 // pred_check
      _
    $region15: #{model_forward.1} parent=1 // pred_check_branch
      %20 = sbr.rel (0) target = $region17
    $region16: #{model_forward.1} parent=1 // pred_region
      %22 = vsyncadd [#allocation3], 0
      %s23 = sshll.u32 %s3, 4
      %s24 = int_to_ptr.hbm [resolvable:$true] %s23
      %s25 = sshll.u32 [#allocation2], 4
      %s26 = int_to_ptr.vmem [resolvable:$true] %s25
      %31 = dma.hbm_to_vmem [thread:$0]  %s24, 1024, %s26, [#allocation3], 128, 128, 8
    $region17: #{model_forward.1} parent=1 // pred_fallthru
      _
    // Predicated region
    $region18: #{model_forward.1} parent=1 // pred_check
      _
    $region19: #{model_forward.1} parent=1 // pred_check_branch
      %33 = sbr.rel (0) target = $region21
    $region20: #{model_forward.1} parent=1 // pred_region
      _
    $region21: #{model_forward.1} parent=1 // pred_fallthru
      _
    // Predicated region
    $region22: #{model_forward.1} parent=1 // pred_check
      _
    $region23: #{model_forward.1} parent=1 // pred_check_branch
      %35 = sbr.rel (0) target = $region25
    $region24: #{model_forward.1} parent=1 // pred_region
      _
    $region25: #{model_forward.1} parent=1 // pred_fallthru
      _
    // Predicated region
    $region26: #{model_forward.1} parent=1 // pred_check
      _
    $region27: #{model_forward.1} parent=1 // pred_check_branch
      %37 = sbr.rel (0) target = $region29
    $region28: #{model_forward.1} parent=1 // pred_region
      _
    $region29: #{model_forward.1} parent=1 // pred_fallthru
      _
    // Predicated region
    $region30: #{model_forward.1} parent=1 // pred_check
      _
    $region31: #{model_forward.1} parent=1 // pred_check_branch
      %39 = sbr.rel (0) target = $region33
    $region32: #{model_forward.1} parent=1 // pred_region
      %41 = dma.done [#allocation3], 1024
    $region33: #{model_forward.1} parent=1 // pred_fallthru
      _
    %v43 = vld [vmem:[%s0] sm:$0xf]
    %v44 = vld [vmem:[%s0 + $0x4] sm:$0xf]
    %v45 = vld [vmem:[%s1] sm:$0x3]
    %v46 = vld [vmem:[%s2] sm:$0x1]
    %v48 = vperm.slane %v46, 0
    %v52 = vunpack.c.l.b16 %v43
    %v53 = vunpack.c.l.b16 %v44
    %v54 = vpack.c.b16 %v53, %v52
    %vm55 = vcmask 31744
    %v57 = vsel %vm55, %v54, 0
    %vm59 = vcmask 1041408
    %v61 = vsel %vm59, %v45, 0
    %63 = vmatpush.bf16.msra.mxu0 0
    %64 = vmatpush.bf16.msra.mxu0 0
    %65 = vmatpush.bf16.msra.mxu0 0
    %66 = vmatpush.bf16.msra.mxu0 0
    %67 = vmatpush.bf16.msra.mxu0 0
    %68 = vmatpush.bf16.msra.mxu0 0
    %69 = vmatpush.bf16.msra.mxu0 0
    %70 = vmatpush.bf16.msra.mxu0 %v61
    %71 = vmatmul.bf16.gmra.mxu0 %v57
    %v72 = vpop.f32.mrf.mxu0
    %v73 = vadd.f32 %v48, %v72
    %v74 = vpop.f32.mrf.mxu0
    %v75 = vadd.f32 %v48, %v74
    %76 = vdwg.mxu0
    %v77 = vld [vmem:[#allocation2] sm:$0xff]
    %v78 = vld [vmem:[#allocation2 + $0x8] sm:$0xff]
    %v79 = vld [vmem:[#allocation2 + $0x10] sm:$0xff]
    %v80 = vld [vmem:[#allocation2 + $0x18] sm:$0xff]
    %v81 = vld [vmem:[#allocation2 + $0x20] sm:$0xff]
    %v82 = vld [vmem:[#allocation2 + $0x28] sm:$0xff]
    %v83 = vld [vmem:[#allocation2 + $0x30] sm:$0xff]
    %v84 = vld [vmem:[#allocation2 + $0x38] sm:$0xff]
    %v85 = vld [vmem:[%s4] sm:$0x1]
    %v86 = vxor.u32 %v73, 2147483648
    %v87 = vmul.f32 %v86, 1.442695
    %v88 = vpow.pop %v87
    %v89 = vadd.f32 %v88, 1.0
    %v90 = vrcp.pop %v89
    %v91 = vmul.f32 %v89, %v90
    %v92 = vsub.f32 1.0, %v91
    %v93 = vmul.f32 %v90, %v92
    %v94 = vadd.f32 %v90, %v93
    %vm95 = vweird.f32 %v89
    %vm96 = vweird.f32 %v90
    %vm97 = vmor %vm95, %vm96
    %v98 = vsel %vm97, %v90, %v94
    %v99 = vand.u32 2147483647, %v89
    %vm100 = vcmp.eq.f32.partialorder %v99, 8.507059e+37
    %v101 = vand.u32 %v89, 2147483648
    %v102 = vor.u32 1.1754944e-38, %v101
    %v103 = vsel %vm100, %v102, %v98
    %v104 = vmul.f32 1.0, %v103
    %v105 = vtanh.pop %v73
    %v106 = vmul.f32 %v104, 0.0
    %108 = vrot.lane.b32.xlu0 %v105, 64
    %v109 = vpop.permute.xlu0 %108
    %v111 = vmul.f32 %v104, %v109
    %113 = vrot.lane.b32.xlu0 %v111, 32
    %v114 = vpop.permute.xlu0 %113
    %v116 = vadd.f32 %v106, %v114
    %v117 = vtanh.pop %v116
    %119 = vrot.lane.b32.xlu0 %v117, 64
    %v120 = vpop.permute.xlu0 %119
    %v122 = vmul.f32 %v104, %v120
    %124 = vrot.lane.b32.xlu0 %v122, 32
    %v125 = vpop.permute.xlu0 %124
    %vm127 = vcmask 261120
    %v128 = vsel %vm127, %v125, 0.0
    %v129 = vpack.c.bf16 %v128, %v128
    %v138 = vunpack.c.l.b16 %v77
    %v139 = vunpack.c.h.b16 %v77
    %v140 = vunpack.c.l.b16 %v78
    %v141 = vunpack.c.h.b16 %v78
    %v142 = vunpack.c.l.b16 %v79
    %v143 = vunpack.c.h.b16 %v79
    %v144 = vunpack.c.l.b16 %v80
    %v145 = vunpack.c.h.b16 %v80
    %v146 = vunpack.c.l.b16 %v81
    %v147 = vunpack.c.h.b16 %v81
    %v148 = vunpack.c.l.b16 %v82
    %v149 = vunpack.c.h.b16 %v82
    %v150 = vunpack.c.l.b16 %v83
    %v151 = vunpack.c.h.b16 %v83
    %v152 = vunpack.c.l.b16 %v84
    %v153 = vunpack.c.h.b16 %v84
    %v154 = vpack.c.b16 %v140, %v138
    %v155 = vpack.c.b16 %v141, %v139
    %v156 = vpack.c.b16 %v144, %v142
    %v157 = vpack.c.b16 %v145, %v143
    %v158 = vpack.c.b16 %v148, %v146
    %v159 = vpack.c.b16 %v149, %v147
    %v160 = vpack.c.b16 %v152, %v150
    %v161 = vpack.c.b16 %v153, %v151
    %vm170 = vcmask 523264
    %v172 = vsel %vm170, %v129, 0
    %174 = vmatpush.bf16.msra.mxu0 0
    %175 = vmatpush.bf16.msra.mxu0 0
    %176 = vmatpush.bf16.msra.mxu0 0
    %177 = vmatpush.bf16.msra.mxu0 0
    %178 = vmatpush.bf16.msra.mxu0 %v160
    %179 = vmatpush.bf16.msra.mxu0 %v158
    %180 = vmatpush.bf16.msra.mxu0 %v156
    %181 = vmatpush.bf16.msra.mxu0 %v154
    %182 = vmatmul.bf16.gmra.mxu0 %v172
    %v183 = vpop.f32.mrf.mxu0
    %v184 = vadd.f32 0.0, %v183
    %v185 = vpop.f32.mrf.mxu0
    %186 = vdwg.mxu0
    %187 = vmatpush.bf16.msra.mxu0 0
    %188 = vmatpush.bf16.msra.mxu0 0
    %189 = vmatpush.bf16.msra.mxu0 0
    %190 = vmatpush.bf16.msra.mxu0 0
    %191 = vmatpush.bf16.msra.mxu0 %v161
    %192 = vmatpush.bf16.msra.mxu0 %v159
    %193 = vmatpush.bf16.msra.mxu0 %v157
    %194 = vmatpush.bf16.msra.mxu0 %v155
    %195 = vmatmul.bf16.gmra.mxu0 %v172
    %v196 = vpop.f32.mrf.mxu0
    %v197 = vadd.f32 0.0, %v196
    %v198 = vpop.f32.mrf.mxu0
    %199 = vdwg.mxu0
    %v201 = vrot.slane %v73, 2
    %v203 = vadd.f32 %v184, %v201
    %v204 = vxor.u32 %v203, 2147483648
    %v205 = vmul.f32 %v204, 1.442695
    %v206 = vpow.pop %v205
    %v207 = vadd.f32 %v206, 1.0
    %v208 = vrcp.pop %v207
    %v209 = vmul.f32 %v207, %v208
    %v210 = vsub.f32 1.0, %v209
    %v211 = vmul.f32 %v208, %v210
    %v212 = vadd.f32 %v208, %v211
    %vm213 = vweird.f32 %v207
    %vm214 = vweird.f32 %v208
    %vm215 = vmor %vm213, %vm214
    %v216 = vsel %vm215, %v208, %v212
    %v217 = vand.u32 2147483647, %v207
    %vm218 = vcmp.eq.f32.partialorder %v217, 8.507059e+37
    %v219 = vand.u32 %v207, 2147483648
    %v220 = vor.u32 1.1754944e-38, %v219
    %v221 = vsel %vm218, %v220, %v216
    %v222 = vmul.f32 1.0, %v221
    %v223 = vtanh.pop %v203
    %v224 = vmul.f32 %v222, %v116
    %226 = vrot.lane.b32.xlu0 %v223, 64
    %v227 = vpop.permute.xlu0 %226
    %v229 = vmul.f32 %v222, %v227
    %231 = vrot.lane.b32.xlu0 %v229, 32
    %v232 = vpop.permute.xlu0 %231
    %v234 = vadd.f32 %v224, %v232
    %v235 = vtanh.pop %v234
    %237 = vrot.lane.b32.xlu0 %v235, 64
    %v238 = vpop.permute.xlu0 %237
    %v240 = vmul.f32 %v222, %v238
    %v242 = vperm.slane %v85, 0
    %v244 = vadd.f32 %v197, %v242
    %v245 = vxor.u32 %v244, 2147483648
    %v246 = vmul.f32 %v245, 1.442695
    %v247 = vpow.pop %v246
    %v248 = vadd.f32 %v247, 1.0
    %v249 = vrcp.pop %v248
    %v250 = vmul.f32 %v248, %v249
    %v251 = vsub.f32 1.0, %v250
    %v252 = vmul.f32 %v249, %v251
    %v253 = vadd.f32 %v249, %v252
    %vm254 = vweird.f32 %v248
    %vm255 = vweird.f32 %v249
    %vm256 = vmor %vm254, %vm255
    %v257 = vsel %vm256, %v249, %v253
    %v258 = vand.u32 2147483647, %v248
    %vm259 = vcmp.eq.f32.partialorder %v258, 8.507059e+37
    %v260 = vand.u32 %v248, 2147483648
    %v261 = vor.u32 1.1754944e-38, %v260
    %v262 = vsel %vm259, %v261, %v257
    %v263 = vmul.f32 1.0, %v262
    %v264 = vtanh.pop %v244
    %v265 = vmul.f32 %v263, 0.0
    %267 = vrot.lane.b32.xlu0 %v264, 64
    %v268 = vpop.permute.xlu0 %267
    %v270 = vmul.f32 %v263, %v268
    %272 = vrot.lane.b32.xlu0 %v270, 32
    %v273 = vpop.permute.xlu0 %272
    %v275 = vadd.f32 %v265, %v273
    %v276 = vtanh.pop %v275
    %278 = vrot.lane.b32.xlu0 %v276, 64
    %v279 = vpop.permute.xlu0 %278
    %v281 = vmul.f32 %v263, %v279
    %283 = vrot.lane.b32.xlu0 %v240, 32
    %v284 = vpop.permute.xlu0 %283
    %287 = vrot.lane.b32.xlu0 %v281, 64
    %v288 = vpop.permute.xlu0 %287
    %v290 = vsel %vm127, %v284, %v288
    %v291 = vpack.c.bf16 %v290, %v290
    %v293 = vsel %vm170, %v291, 0
    %295 = vmatpush.bf16.msra.mxu0 0
    %296 = vmatpush.bf16.msra.mxu0 0
    %297 = vmatpush.bf16.msra.mxu0 0
    %298 = vmatpush.bf16.msra.mxu0 0
    %299 = vmatpush.bf16.msra.mxu0 %v160
    %300 = vmatpush.bf16.msra.mxu0 %v158
    %301 = vmatpush.bf16.msra.mxu0 %v156
    %302 = vmatpush.bf16.msra.mxu0 %v154
    %303 = vmatmul.bf16.gmra.mxu0 %v293
    %v304 = vpop.f32.mrf.mxu0
    %v305 = vadd.f32 0.0, %v304
    %v306 = vpop.f32.mrf.mxu0
    %307 = vdwg.mxu0
    %308 = vmatpush.bf16.msra.mxu0 0
    %309 = vmatpush.bf16.msra.mxu0 0
    %310 = vmatpush.bf16.msra.mxu0 0
    %311 = vmatpush.bf16.msra.mxu0 0
    %312 = vmatpush.bf16.msra.mxu0 %v161
    %313 = vmatpush.bf16.msra.mxu0 %v159
    %314 = vmatpush.bf16.msra.mxu0 %v157
    %315 = vmatpush.bf16.msra.mxu0 %v155
    %316 = vmatmul.bf16.gmra.mxu0 %v293
    %v317 = vpop.f32.mrf.mxu0
    %v318 = vadd.f32 0.0, %v317
    %v319 = vpop.f32.mrf.mxu0
    %320 = vdwg.mxu0
    %v321 = vrot.slane %v73, 4
    %v323 = vadd.f32 %v305, %v321
    %v324 = vxor.u32 %v323, 2147483648
    %v325 = vmul.f32 %v324, 1.442695
    %v326 = vpow.pop %v325
    %v327 = vadd.f32 %v326, 1.0
    %v328 = vrcp.pop %v327
    %v329 = vmul.f32 %v327, %v328
    %v330 = vsub.f32 1.0, %v329
    %v331 = vmul.f32 %v328, %v330
    %v332 = vadd.f32 %v328, %v331
    %vm333 = vweird.f32 %v327
    %vm334 = vweird.f32 %v328
    %vm335 = vmor %vm333, %vm334
    %v336 = vsel %vm335, %v328, %v332
    %v337 = vand.u32 2147483647, %v327
    %vm338 = vcmp.eq.f32.partialorder %v337, 8.507059e+37
    %v339 = vand.u32 %v327, 2147483648
    %v340 = vor.u32 1.1754944e-38, %v339
    %v341 = vsel %vm338, %v340, %v336
    %v342 = vmul.f32 1.0, %v341
    %v343 = vtanh.pop %v323
    %v344 = vmul.f32 %v342, %v234
    %346 = vrot.lane.b32.xlu0 %v343, 64
    %v347 = vpop.permute.xlu0 %346
    %v349 = vmul.f32 %v342, %v347
    %351 = vrot.lane.b32.xlu0 %v349, 32
    %v352 = vpop.permute.xlu0 %351
    %v354 = vadd.f32 %v344, %v352
    %v355 = vtanh.pop %v354
    %357 = vrot.lane.b32.xlu0 %v355, 64
    %v358 = vpop.permute.xlu0 %357
    %v360 = vmul.f32 %v342, %v358
    %v361 = vadd.f32 %v318, %v242
    %v362 = vxor.u32 %v361, 2147483648
    %v363 = vmul.f32 %v362, 1.442695
    %v364 = vpow.pop %v363
    %v365 = vadd.f32 %v364, 1.0
    %v366 = vrcp.pop %v365
    %v367 = vmul.f32 %v365, %v366
    %v368 = vsub.f32 1.0, %v367
    %v369 = vmul.f32 %v366, %v368
    %v370 = vadd.f32 %v366, %v369
    %vm371 = vweird.f32 %v365
    %vm372 = vweird.f32 %v366
    %vm373 = vmor %vm371, %vm372
    %v374 = vsel %vm373, %v366, %v370
    %v375 = vand.u32 2147483647, %v365
    %vm376 = vcmp.eq.f32.partialorder %v375, 8.507059e+37
    %v377 = vand.u32 %v365, 2147483648
    %v378 = vor.u32 1.1754944e-38, %v377
    %v379 = vsel %vm376, %v378, %v374
    %v380 = vmul.f32 1.0, %v379
    %v381 = vtanh.pop %v361
    %v382 = vmul.f32 %v380, %v275
    %384 = vrot.lane.b32.xlu0 %v381, 64
    %v385 = vpop.permute.xlu0 %384
    %v387 = vmul.f32 %v380, %v385
    %389 = vrot.lane.b32.xlu0 %v387, 32
    %v390 = vpop.permute.xlu0 %389
    %v392 = vadd.f32 %v382, %v390
    %v393 = vtanh.pop %v392
    %395 = vrot.lane.b32.xlu0 %v393, 64
    %v396 = vpop.permute.xlu0 %395
    %v398 = vmul.f32 %v380, %v396
    %400 = vrot.lane.b32.xlu0 %v360, 32
    %v401 = vpop.permute.xlu0 %400
    %404 = vrot.lane.b32.xlu0 %v398, 64
    %v405 = vpop.permute.xlu0 %404
    %v407 = vsel %vm127, %v401, %v405
    %v408 = vpack.c.bf16 %v407, %v407
    %v410 = vsel %vm170, %v408, 0
    %412 = vmatpush.bf16.msra.mxu0 0
    %413 = vmatpush.bf16.msra.mxu0 0
    %414 = vmatpush.bf16.msra.mxu0 0
    %415 = vmatpush.bf16.msra.mxu0 0
    %416 = vmatpush.bf16.msra.mxu0 %v160
    %417 = vmatpush.bf16.msra.mxu0 %v158
    %418 = vmatpush.bf16.msra.mxu0 %v156
    %419 = vmatpush.bf16.msra.mxu0 %v154
    %420 = vmatmul.bf16.gmra.mxu0 %v410
    %v421 = vpop.f32.mrf.mxu0
    %v422 = vadd.f32 0.0, %v421
    %v423 = vpop.f32.mrf.mxu0
    %424 = vdwg.mxu0
    %425 = vmatpush.bf16.msra.mxu0 0
    %426 = vmatpush.bf16.msra.mxu0 0
    %427 = vmatpush.bf16.msra.mxu0 0
    %428 = vmatpush.bf16.msra.mxu0 0
    %429 = vmatpush.bf16.msra.mxu0 %v161
    %430 = vmatpush.bf16.msra.mxu0 %v159
    %431 = vmatpush.bf16.msra.mxu0 %v157
    %432 = vmatpush.bf16.msra.mxu0 %v155
    %433 = vmatmul.bf16.gmra.mxu0 %v410
    %v434 = vpop.f32.mrf.mxu0
    %v435 = vadd.f32 0.0, %v434
    %v436 = vpop.f32.mrf.mxu0
    %437 = vdwg.mxu0
    %v438 = vrot.slane %v73, 6
    %v440 = vadd.f32 %v422, %v438
    %v441 = vxor.u32 %v440, 2147483648
    %v442 = vmul.f32 %v441, 1.442695
    %v443 = vpow.pop %v442
    %v444 = vadd.f32 %v443, 1.0
    %v445 = vrcp.pop %v444
    %v446 = vmul.f32 %v444, %v445
    %v447 = vsub.f32 1.0, %v446
    %v448 = vmul.f32 %v445, %v447
    %v449 = vadd.f32 %v445, %v448
    %vm450 = vweird.f32 %v444
    %vm451 = vweird.f32 %v445
    %vm452 = vmor %vm450, %vm451
    %v453 = vsel %vm452, %v445, %v449
    %v454 = vand.u32 2147483647, %v444
    %vm455 = vcmp.eq.f32.partialorder %v454, 8.507059e+37
    %v456 = vand.u32 %v444, 2147483648
    %v457 = vor.u32 1.1754944e-38, %v456
    %v458 = vsel %vm455, %v457, %v453
    %v459 = vmul.f32 1.0, %v458
    %v460 = vtanh.pop %v440
    %v461 = vmul.f32 %v459, %v354
    %463 = vrot.lane.b32.xlu0 %v460, 64
    %v464 = vpop.permute.xlu0 %463
    %v466 = vmul.f32 %v459, %v464
    %468 = vrot.lane.b32.xlu0 %v466, 32
    %v469 = vpop.permute.xlu0 %468
    %v471 = vadd.f32 %v461, %v469
    %v472 = vtanh.pop %v471
    %474 = vrot.lane.b32.xlu0 %v472, 64
    %v475 = vpop.permute.xlu0 %474
    %v477 = vmul.f32 %v459, %v475
    %v478 = vadd.f32 %v435, %v242
    %v479 = vxor.u32 %v478, 2147483648
    %v480 = vmul.f32 %v479, 1.442695
    %v481 = vpow.pop %v480
    %v482 = vadd.f32 %v481, 1.0
    %v483 = vrcp.pop %v482
    %v484 = vmul.f32 %v482, %v483
    %v485 = vsub.f32 1.0, %v484
    %v486 = vmul.f32 %v483, %v485
    %v487 = vadd.f32 %v483, %v486
    %vm488 = vweird.f32 %v482
    %vm489 = vweird.f32 %v483
    %vm490 = vmor %vm488, %vm489
    %v491 = vsel %vm490, %v483, %v487
    %v492 = vand.u32 2147483647, %v482
    %vm493 = vcmp.eq.f32.partialorder %v492, 8.507059e+37
    %v494 = vand.u32 %v482, 2147483648
    %v495 = vor.u32 1.1754944e-38, %v494
    %v496 = vsel %vm493, %v495, %v491
    %v497 = vmul.f32 1.0, %v496
    %v498 = vtanh.pop %v478
    %v499 = vmul.f32 %v497, %v392
    %501 = vrot.lane.b32.xlu0 %v498, 64
    %v502 = vpop.permute.xlu0 %501
    %v504 = vmul.f32 %v497, %v502
    %506 = vrot.lane.b32.xlu0 %v504, 32
    %v507 = vpop.permute.xlu0 %506
    %v509 = vadd.f32 %v499, %v507
    %v510 = vtanh.pop %v509
    %512 = vrot.lane.b32.xlu0 %v510, 64
    %v513 = vpop.permute.xlu0 %512
    %v515 = vmul.f32 %v497, %v513
    %517 = vrot.lane.b32.xlu0 %v477, 32
    %v518 = vpop.permute.xlu0 %517
    %521 = vrot.lane.b32.xlu0 %v515, 64
    %v522 = vpop.permute.xlu0 %521
    %v524 = vsel %vm127, %v518, %v522
    %v525 = vpack.c.bf16 %v524, %v524
    %v527 = vsel %vm170, %v525, 0
    %529 = vmatpush.bf16.msra.mxu0 0
    %530 = vmatpush.bf16.msra.mxu0 0
    %531 = vmatpush.bf16.msra.mxu0 0
    %532 = vmatpush.bf16.msra.mxu0 0
    %533 = vmatpush.bf16.msra.mxu0 %v160
    %534 = vmatpush.bf16.msra.mxu0 %v158
    %535 = vmatpush.bf16.msra.mxu0 %v156
    %536 = vmatpush.bf16.msra.mxu0 %v154
    %537 = vmatmul.bf16.gmra.mxu0 %v527
    %v538 = vpop.f32.mrf.mxu0
    %v539 = vadd.f32 0.0, %v538
    %v540 = vpop.f32.mrf.mxu0
    %541 = vdwg.mxu0
    %542 = vmatpush.bf16.msra.mxu0 0
    %543 = vmatpush.bf16.msra.mxu0 0
    %544 = vmatpush.bf16.msra.mxu0 0
    %545 = vmatpush.bf16.msra.mxu0 0
    %546 = vmatpush.bf16.msra.mxu0 %v161
    %547 = vmatpush.bf16.msra.mxu0 %v159
    %548 = vmatpush.bf16.msra.mxu0 %v157
    %549 = vmatpush.bf16.msra.mxu0 %v155
    %550 = vmatmul.bf16.gmra.mxu0 %v527
    %v551 = vpop.f32.mrf.mxu0
    %v552 = vadd.f32 0.0, %v551
    %v553 = vpop.f32.mrf.mxu0
    %554 = vdwg.mxu0
    %v555 = vadd.f32 %v539, %v75
    %v556 = vxor.u32 %v555, 2147483648
    %v557 = vmul.f32 %v556, 1.442695
    %v558 = vpow.pop %v557
    %v559 = vadd.f32 %v558, 1.0
    %v560 = vrcp.pop %v559
    %v561 = vmul.f32 %v559, %v560
    %v562 = vsub.f32 1.0, %v561
    %v563 = vmul.f32 %v560, %v562
    %v564 = vadd.f32 %v560, %v563
    %vm565 = vweird.f32 %v559
    %vm566 = vweird.f32 %v560
    %vm567 = vmor %vm565, %vm566
    %v568 = vsel %vm567, %v560, %v564
    %v569 = vand.u32 2147483647, %v559
    %vm570 = vcmp.eq.f32.partialorder %v569, 8.507059e+37
    %v571 = vand.u32 %v559, 2147483648
    %v572 = vor.u32 1.1754944e-38, %v571
    %v573 = vsel %vm570, %v572, %v568
    %v574 = vmul.f32 1.0, %v573
    %v575 = vtanh.pop %v555
    %v576 = vmul.f32 %v574, %v471
    %578 = vrot.lane.b32.xlu0 %v575, 64
    %v579 = vpop.permute.xlu0 %578
    %v581 = vmul.f32 %v574, %v579
    %583 = vrot.lane.b32.xlu0 %v581, 32
    %v584 = vpop.permute.xlu0 %583
    %v586 = vadd.f32 %v576, %v584
    %v587 = vtanh.pop %v586
    %589 = vrot.lane.b32.xlu0 %v587, 64
    %v590 = vpop.permute.xlu0 %589
    %v592 = vmul.f32 %v574, %v590
    %v593 = vadd.f32 %v552, %v242
    %v594 = vxor.u32 %v593, 2147483648
    %v595 = vmul.f32 %v594, 1.442695
    %v596 = vpow.pop %v595
    %v597 = vadd.f32 %v596, 1.0
    %v598 = vrcp.pop %v597
    %v599 = vmul.f32 %v597, %v598
    %v600 = vsub.f32 1.0, %v599
    %v601 = vmul.f32 %v598, %v600
    %v602 = vadd.f32 %v598, %v601
    %vm603 = vweird.f32 %v597
    %vm604 = vweird.f32 %v598
    %vm605 = vmor %vm603, %vm604
    %v606 = vsel %vm605, %v598, %v602
    %v607 = vand.u32 2147483647, %v597
    %vm608 = vcmp.eq.f32.partialorder %v607, 8.507059e+37
    %v609 = vand.u32 %v597, 2147483648
    %v610 = vor.u32 1.1754944e-38, %v609
    %v611 = vsel %vm608, %v610, %v606
    %v612 = vmul.f32 1.0, %v611
    %v613 = vtanh.pop %v593
    %v614 = vmul.f32 %v612, %v509
    %616 = vrot.lane.b32.xlu0 %v613, 64
    %v617 = vpop.permute.xlu0 %616
    %v619 = vmul.f32 %v612, %v617
    %621 = vrot.lane.b32.xlu0 %v619, 32
    %v622 = vpop.permute.xlu0 %621
    %v624 = vadd.f32 %v614, %v622
    %v625 = vtanh.pop %v624
    %627 = vrot.lane.b32.xlu0 %v625, 64
    %v628 = vpop.permute.xlu0 %627
    %v630 = vmul.f32 %v612, %v628
    %632 = vrot.lane.b32.xlu0 %v592, 32
    %v633 = vpop.permute.xlu0 %632
    %636 = vrot.lane.b32.xlu0 %v630, 64
    %v637 = vpop.permute.xlu0 %636
    %v639 = vsel %vm127, %v633, %v637
    %v640 = vpack.c.bf16 %v639, %v639
    %v642 = vsel %vm170, %v640, 0
    %644 = vmatpush.bf16.msra.mxu0 0
    %645 = vmatpush.bf16.msra.mxu0 0
    %646 = vmatpush.bf16.msra.mxu0 0
    %647 = vmatpush.bf16.msra.mxu0 0
    %648 = vmatpush.bf16.msra.mxu0 %v160
    %649 = vmatpush.bf16.msra.mxu0 %v158
    %650 = vmatpush.bf16.msra.mxu0 %v156
    %651 = vmatpush.bf16.msra.mxu0 %v154
    %652 = vmatmul.bf16.gmra.mxu0 %v642
    %v653 = vpop.f32.mrf.mxu0
    %v654 = vadd.f32 0.0, %v653
    %v655 = vpop.f32.mrf.mxu0
    %656 = vdwg.mxu0
    %657 = vmatpush.bf16.msra.mxu0 0
    %658 = vmatpush.bf16.msra.mxu0 0
    %659 = vmatpush.bf16.msra.mxu0 0
    %660 = vmatpush.bf16.msra.mxu0 0
    %661 = vmatpush.bf16.msra.mxu0 %v161
    %662 = vmatpush.bf16.msra.mxu0 %v159
    %663 = vmatpush.bf16.msra.mxu0 %v157
    %664 = vmatpush.bf16.msra.mxu0 %v155
    %665 = vmatmul.bf16.gmra.mxu0 %v642
    %v666 = vpop.f32.mrf.mxu0
    %v667 = vadd.f32 0.0, %v666
    %v668 = vpop.f32.mrf.mxu0
    %669 = vdwg.mxu0
    %v671 = vrot.slane %v75, 2
    %v673 = vadd.f32 %v654, %v671
    %v674 = vxor.u32 %v673, 2147483648
    %v675 = vmul.f32 %v674, 1.442695
    %v676 = vpow.pop %v675
    %v677 = vadd.f32 %v676, 1.0
    %v678 = vrcp.pop %v677
    %v679 = vmul.f32 %v677, %v678
    %v680 = vsub.f32 1.0, %v679
    %v681 = vmul.f32 %v678, %v680
    %v682 = vadd.f32 %v678, %v681
    %vm683 = vweird.f32 %v677
    %vm684 = vweird.f32 %v678
    %vm685 = vmor %vm683, %vm684
    %v686 = vsel %vm685, %v678, %v682
    %v687 = vand.u32 2147483647, %v677
    %vm688 = vcmp.eq.f32.partialorder %v687, 8.507059e+37
    %v689 = vand.u32 %v677, 2147483648
    %v690 = vor.u32 1.1754944e-38, %v689
    %v691 = vsel %vm688, %v690, %v686
    %v692 = vmul.f32 1.0, %v691
    %v693 = vtanh.pop %v673
    %v694 = vmul.f32 %v692, %v586
    %696 = vrot.lane.b32.xlu0 %v693, 64
    %v697 = vpop.permute.xlu0 %696
    %v699 = vmul.f32 %v692, %v697
    %701 = vrot.lane.b32.xlu0 %v699, 32
    %v702 = vpop.permute.xlu0 %701
    %v704 = vadd.f32 %v694, %v702
    %v705 = vtanh.pop %v704
    %707 = vrot.lane.b32.xlu0 %v705, 64
    %v708 = vpop.permute.xlu0 %707
    %v710 = vmul.f32 %v692, %v708
    %v711 = vadd.f32 %v667, %v242
    %v712 = vxor.u32 %v711, 2147483648
    %v713 = vmul.f32 %v712, 1.442695
    %v714 = vpow.pop %v713
    %v715 = vadd.f32 %v714, 1.0
    %v716 = vrcp.pop %v715
    %v717 = vmul.f32 %v715, %v716
    %v718 = vsub.f32 1.0, %v717
    %v719 = vmul.f32 %v716, %v718
    %v720 = vadd.f32 %v716, %v719
    %vm721 = vweird.f32 %v715
    %vm722 = vweird.f32 %v716
    %vm723 = vmor %vm721, %vm722
    %v724 = vsel %vm723, %v716, %v720
    %v725 = vand.u32 2147483647, %v715
    %vm726 = vcmp.eq.f32.partialorder %v725, 8.507059e+37
    %v727 = vand.u32 %v715, 2147483648
    %v728 = vor.u32 1.1754944e-38, %v727
    %v729 = vsel %vm726, %v728, %v724
    %v730 = vmul.f32 1.0, %v729
    %v731 = vtanh.pop %v711
    %v732 = vmul.f32 %v730, %v624
    %734 = vrot.lane.b32.xlu0 %v731, 64
    %v735 = vpop.permute.xlu0 %734
    %v737 = vmul.f32 %v730, %v735
    %739 = vrot.lane.b32.xlu0 %v737, 32
    %v740 = vpop.permute.xlu0 %739
    %v742 = vadd.f32 %v732, %v740
    %v743 = vtanh.pop %v742
    %745 = vrot.lane.b32.xlu0 %v743, 64
    %v746 = vpop.permute.xlu0 %745
    %v748 = vmul.f32 %v730, %v746
    %750 = vrot.lane.b32.xlu0 %v710, 32
    %v751 = vpop.permute.xlu0 %750
    %754 = vrot.lane.b32.xlu0 %v748, 64
    %v755 = vpop.permute.xlu0 %754
    %v757 = vsel %vm127, %v751, %v755
    %v758 = vpack.c.bf16 %v757, %v757
    %v760 = vsel %vm170, %v758, 0
    %762 = vmatpush.bf16.msra.mxu0 0
    %763 = vmatpush.bf16.msra.mxu0 0
    %764 = vmatpush.bf16.msra.mxu0 0
    %765 = vmatpush.bf16.msra.mxu0 0
    %766 = vmatpush.bf16.msra.mxu0 %v160
    %767 = vmatpush.bf16.msra.mxu0 %v158
    %768 = vmatpush.bf16.msra.mxu0 %v156
    %769 = vmatpush.bf16.msra.mxu0 %v154
    %770 = vmatmul.bf16.gmra.mxu0 %v760
    %v771 = vpop.f32.mrf.mxu0
    %v772 = vadd.f32 0.0, %v771
    %v773 = vpop.f32.mrf.mxu0
    %774 = vdwg.mxu0
    %775 = vmatpush.bf16.msra.mxu0 0
    %776 = vmatpush.bf16.msra.mxu0 0
    %777 = vmatpush.bf16.msra.mxu0 0
    %778 = vmatpush.bf16.msra.mxu0 0
    %779 = vmatpush.bf16.msra.mxu0 %v161
    %780 = vmatpush.bf16.msra.mxu0 %v159
    %781 = vmatpush.bf16.msra.mxu0 %v157
    %782 = vmatpush.bf16.msra.mxu0 %v155
    %783 = vmatmul.bf16.gmra.mxu0 %v760
    %v784 = vpop.f32.mrf.mxu0
    %v785 = vadd.f32 0.0, %v784
    %v786 = vpop.f32.mrf.mxu0
    %787 = vdwg.mxu0
    %v788 = vrot.slane %v75, 4
    %v790 = vadd.f32 %v772, %v788
    %v791 = vxor.u32 %v790, 2147483648
    %v792 = vmul.f32 %v791, 1.442695
    %v793 = vpow.pop %v792
    %v794 = vadd.f32 %v793, 1.0
    %v795 = vrcp.pop %v794
    %v796 = vmul.f32 %v794, %v795
    %v797 = vsub.f32 1.0, %v796
    %v798 = vmul.f32 %v795, %v797
    %v799 = vadd.f32 %v795, %v798
    %vm800 = vweird.f32 %v794
    %vm801 = vweird.f32 %v795
    %vm802 = vmor %vm800, %vm801
    %v803 = vsel %vm802, %v795, %v799
    %v804 = vand.u32 2147483647, %v794
    %vm805 = vcmp.eq.f32.partialorder %v804, 8.507059e+37
    %v806 = vand.u32 %v794, 2147483648
    %v807 = vor.u32 1.1754944e-38, %v806
    %v808 = vsel %vm805, %v807, %v803
    %v809 = vmul.f32 1.0, %v808
    %v810 = vtanh.pop %v790
    %v811 = vmul.f32 %v809, %v704
    %813 = vrot.lane.b32.xlu0 %v810, 64
    %v814 = vpop.permute.xlu0 %813
    %v816 = vmul.f32 %v809, %v814
    %818 = vrot.lane.b32.xlu0 %v816, 32
    %v819 = vpop.permute.xlu0 %818
    %v821 = vadd.f32 %v811, %v819
    %v822 = vtanh.pop %v821
    %824 = vrot.lane.b32.xlu0 %v822, 64
    %v825 = vpop.permute.xlu0 %824
    %v827 = vmul.f32 %v809, %v825
    %v828 = vadd.f32 %v785, %v242
    %v829 = vxor.u32 %v828, 2147483648
    %v830 = vmul.f32 %v829, 1.442695
    %v831 = vpow.pop %v830
    %v832 = vadd.f32 %v831, 1.0
    %v833 = vrcp.pop %v832
    %v834 = vmul.f32 %v832, %v833
    %v835 = vsub.f32 1.0, %v834
    %v836 = vmul.f32 %v833, %v835
    %v837 = vadd.f32 %v833, %v836
    %vm838 = vweird.f32 %v832
    %vm839 = vweird.f32 %v833
    %vm840 = vmor %vm838, %vm839
    %v841 = vsel %vm840, %v833, %v837
    %v842 = vand.u32 2147483647, %v832
    %vm843 = vcmp.eq.f32.partialorder %v842, 8.507059e+37
    %v844 = vand.u32 %v832, 2147483648
    %v845 = vor.u32 1.1754944e-38, %v844
    %v846 = vsel %vm843, %v845, %v841
    %v847 = vmul.f32 1.0, %v846
    %v848 = vtanh.pop %v828
    %v849 = vmul.f32 %v847, %v742
    %851 = vrot.lane.b32.xlu0 %v848, 64
    %v852 = vpop.permute.xlu0 %851
    %v854 = vmul.f32 %v847, %v852
    %856 = vrot.lane.b32.xlu0 %v854, 32
    %v857 = vpop.permute.xlu0 %856
    %v859 = vadd.f32 %v849, %v857
    %v860 = vtanh.pop %v859
    %862 = vrot.lane.b32.xlu0 %v860, 64
    %v863 = vpop.permute.xlu0 %862
    %v865 = vmul.f32 %v847, %v863
    %867 = vrot.lane.b32.xlu0 %v827, 32
    %v868 = vpop.permute.xlu0 %867
    %871 = vrot.lane.b32.xlu0 %v865, 64
    %v872 = vpop.permute.xlu0 %871
    %v874 = vsel %vm127, %v868, %v872
    %v875 = vpack.c.bf16 %v874, %v874
    %v877 = vsel %vm170, %v875, 0
    %879 = vmatpush.bf16.msra.mxu0 0
    %880 = vmatpush.bf16.msra.mxu0 0
    %881 = vmatpush.bf16.msra.mxu0 0
    %882 = vmatpush.bf16.msra.mxu0 0
    %883 = vmatpush.bf16.msra.mxu0 %v160
    %884 = vmatpush.bf16.msra.mxu0 %v158
    %885 = vmatpush.bf16.msra.mxu0 %v156
    %886 = vmatpush.bf16.msra.mxu0 %v154
    %887 = vmatmul.bf16.gmra.mxu0 %v877
    %v888 = vpop.f32.mrf.mxu0
    %v889 = vadd.f32 0.0, %v888
    %v890 = vpop.f32.mrf.mxu0
    %891 = vdwg.mxu0
    %892 = vmatpush.bf16.msra.mxu0 0
    %893 = vmatpush.bf16.msra.mxu0 0
    %894 = vmatpush.bf16.msra.mxu0 0
    %895 = vmatpush.bf16.msra.mxu0 0
    %896 = vmatpush.bf16.msra.mxu0 %v161
    %897 = vmatpush.bf16.msra.mxu0 %v159
    %898 = vmatpush.bf16.msra.mxu0 %v157
    %899 = vmatpush.bf16.msra.mxu0 %v155
    %900 = vmatmul.bf16.gmra.mxu0 %v877
    %v901 = vpop.f32.mrf.mxu0
    %v902 = vadd.f32 0.0, %v901
    %v903 = vpop.f32.mrf.mxu0
    %904 = vdwg.mxu0
    %v905 = vrot.slane %v75, 6
    %v907 = vadd.f32 %v889, %v905
    %v908 = vxor.u32 %v907, 2147483648
    %v909 = vmul.f32 %v908, 1.442695
    %v910 = vpow.pop %v909
    %v911 = vadd.f32 %v910, 1.0
    %v912 = vrcp.pop %v911
    %v913 = vmul.f32 %v911, %v912
    %v914 = vsub.f32 1.0, %v913
    %v915 = vmul.f32 %v912, %v914
    %v916 = vadd.f32 %v912, %v915
    %vm917 = vweird.f32 %v911
    %vm918 = vweird.f32 %v912
    %vm919 = vmor %vm917, %vm918
    %v920 = vsel %vm919, %v912, %v916
    %v921 = vand.u32 2147483647, %v911
    %vm922 = vcmp.eq.f32.partialorder %v921, 8.507059e+37
    %v923 = vand.u32 %v911, 2147483648
    %v924 = vor.u32 1.1754944e-38, %v923
    %v925 = vsel %vm922, %v924, %v920
    %v926 = vmul.f32 1.0, %v925
    %v927 = vtanh.pop %v907
    %v928 = vmul.f32 %v926, %v821
    %930 = vrot.lane.b32.xlu0 %v927, 64
    %v931 = vpop.permute.xlu0 %930
    %v933 = vmul.f32 %v926, %v931
    %935 = vrot.lane.b32.xlu0 %v933, 32
    %v936 = vpop.permute.xlu0 %935
    %v938 = vadd.f32 %v928, %v936
    %v939 = vtanh.pop %v938
    %941 = vrot.lane.b32.xlu0 %v939, 64
    %v942 = vpop.permute.xlu0 %941
    %v944 = vmul.f32 %v926, %v942
    %v945 = vadd.f32 %v902, %v242
    %v946 = vxor.u32 %v945, 2147483648
    %v947 = vmul.f32 %v946, 1.442695
    %v948 = vpow.pop %v947
    %v949 = vadd.f32 %v948, 1.0
    %v950 = vrcp.pop %v949
    %v951 = vmul.f32 %v949, %v950
    %v952 = vsub.f32 1.0, %v951
    %v953 = vmul.f32 %v950, %v952
    %v954 = vadd.f32 %v950, %v953
    %vm955 = vweird.f32 %v949
    %vm956 = vweird.f32 %v950
    %vm957 = vmor %vm955, %vm956
    %v958 = vsel %vm957, %v950, %v954
    %v959 = vand.u32 2147483647, %v949
    %vm960 = vcmp.eq.f32.partialorder %v959, 8.507059e+37
    %v961 = vand.u32 %v949, 2147483648
    %v962 = vor.u32 1.1754944e-38, %v961
    %v963 = vsel %vm960, %v962, %v958
    %v964 = vmul.f32 1.0, %v963
    %v965 = vtanh.pop %v945
    %v966 = vmul.f32 %v964, %v859
    %968 = vrot.lane.b32.xlu0 %v965, 64
    %v969 = vpop.permute.xlu0 %968
    %v971 = vmul.f32 %v964, %v969
    %973 = vrot.lane.b32.xlu0 %v971, 32
    %v974 = vpop.permute.xlu0 %973
    %v976 = vadd.f32 %v966, %v974
    %v977 = vtanh.pop %v976
    %979 = vrot.lane.b32.xlu0 %v977, 64
    %v980 = vpop.permute.xlu0 %979
    %v982 = vmul.f32 %v964, %v980
    %984 = vrot.lane.b32.xlu0 %v944, 32
    %v985 = vpop.permute.xlu0 %984
    %988 = vrot.lane.b32.xlu0 %v982, 64
    %v989 = vpop.permute.xlu0 %988
    %v991 = vsel %vm127, %v985, %v989
    %v992 = vpack.c.bf16 %v991, %v991
    %v994 = vsel %vm170, %v992, 0
    %996 = vmatpush.bf16.msra.mxu0 0
    %997 = vmatpush.bf16.msra.mxu0 0
    %998 = vmatpush.bf16.msra.mxu0 0
    %999 = vmatpush.bf16.msra.mxu0 0
    %1000 = vmatpush.bf16.msra.mxu0 %v161
    %1001 = vmatpush.bf16.msra.mxu0 %v159
    %1002 = vmatpush.bf16.msra.mxu0 %v157
    %1003 = vmatpush.bf16.msra.mxu0 %v155
    %1004 = vmatmul.bf16.gmra.mxu0 %v994
    %v1005 = vpop.f32.mrf.mxu0
    %v1006 = vadd.f32 0.0, %v1005
    %v1007 = vpop.f32.mrf.mxu0
    %1008 = vdwg.mxu0
    %v1009 = vadd.f32 %v1006, %v242
    %v1010 = vxor.u32 %v1009, 2147483648
    %v1011 = vmul.f32 %v1010, 1.442695
    %v1012 = vpow.pop %v1011
    %v1013 = vadd.f32 %v1012, 1.0
    %v1014 = vrcp.pop %v1013
    %v1015 = vmul.f32 %v1013, %v1014
    %v1016 = vsub.f32 1.0, %v1015
    %v1017 = vmul.f32 %v1014, %v1016
    %v1018 = vadd.f32 %v1014, %v1017
    %vm1019 = vweird.f32 %v1013
    %vm1020 = vweird.f32 %v1014
    %vm1021 = vmor %vm1019, %vm1020
    %v1022 = vsel %vm1021, %v1014, %v1018
    %v1023 = vand.u32 2147483647, %v1013
    %vm1024 = vcmp.eq.f32.partialorder %v1023, 8.507059e+37
    %v1025 = vand.u32 %v1013, 2147483648
    %v1026 = vor.u32 1.1754944e-38, %v1025
    %v1027 = vsel %vm1024, %v1026, %v1022
    %v1028 = vmul.f32 1.0, %v1027
    %v1029 = vtanh.pop %v1009
    %v1030 = vmul.f32 %v1028, %v976
    %1032 = vrot.lane.b32.xlu0 %v1029, 64
    %v1033 = vpop.permute.xlu0 %1032
    %v1035 = vmul.f32 %v1028, %v1033
    %1037 = vrot.lane.b32.xlu0 %v1035, 32
    %v1038 = vpop.permute.xlu0 %1037
    %v1040 = vadd.f32 %v1030, %v1038
    %v1041 = vtanh.pop %v1040
    %1043 = vrot.lane.b32.xlu0 %v1041, 64
    %v1044 = vpop.permute.xlu0 %1043
    %v1046 = vmul.f32 %v1028, %v1044
    %v1047 = vrot.slane %v865, 6
    %v1049 = vrot.slane %v982, 4
    %v1052 = vrot.slane %v1046, 2
    %v1054 = vsel %vm59, %v748, %v1047
    %vm1055 = vcmask 1043456
    %v1056 = vsel %vm1055, %v1054, %v1049
    %vm1057 = vcmask 1045504
    %v1058 = vsel %vm1057, %v1056, %v1052
    %v1059 = vpack.c.bf16 %v1058, %v1058
    %v1060 = vld [vmem:[%s5] sm:$0xf]
    %v1061 = vld [vmem:[%s5 + $0x4] sm:$0xf]
    %v1062 = vld [vmem:[%s5 + $0x8] sm:$0xf]
    %v1063 = vld [vmem:[%s5 + $0xc] sm:$0xf]
    %v1064 = vld [vmem:[%s6] sm:$0x1]
    %v1066 = vperm.slane %v1064, 0
    %1069 = vrot.lane.b32.xlu0 %v1059, 32
    %v1070 = vpop.permute.xlu0 %1069
    %v1075 = vunpack.c.l.b16 %v1060
    %v1076 = vunpack.c.l.b16 %v1061
    %v1077 = vunpack.c.l.b16 %v1062
    %v1078 = vunpack.c.l.b16 %v1063
    %v1079 = vpack.c.b16 %v1076, %v1075
    %v1080 = vpack.c.b16 %v1078, %v1077
    %v1084 = vsel %vm127, %v1070, 0
    %1086 = vmatpush.bf16.msra.mxu0 0
    %1087 = vmatpush.bf16.msra.mxu0 0
    %1088 = vmatpush.bf16.msra.mxu0 0
    %1089 = vmatpush.bf16.msra.mxu0 0
    %1090 = vmatpush.bf16.msra.mxu0 0
    %1091 = vmatpush.bf16.msra.mxu0 0
    %1092 = vmatpush.bf16.msra.mxu0 %v1080
    %1093 = vmatpush.bf16.msra.mxu0 %v1079
    %1094 = vmatmul.bf16.gmra.mxu0 %v1084
    %v1095 = vpop.f32.mrf.mxu0
    %v1096 = vadd.f32 %v1066, %v1095
    %v1097 = vpop.f32.mrf.mxu0
    %1098 = vdwg.mxu0
    %1099 = vst.msk [vmem:[%s7] sm:$0xff] %vm55, %v1096
    // Predicated region
    $region34: #{model_forward.1} parent=1 // pred_check
      _
    $region35: #{model_forward.1} parent=1 // pred_check_branch
      %1101 = sbr.rel (0) target = $region37
    $region36: #{model_forward.1} parent=1 // pred_region
      _
    $region37: #{model_forward.1} parent=1 // pred_fallthru
      _
    // Predicated region
    $region38: #{model_forward.1} parent=1 // pred_check
      _
    $region39: #{model_forward.1} parent=1 // pred_check_branch
      %1103 = sbr.rel (0) target = $region41
    $region40: #{model_forward.1} parent=1 // pred_region
      _
    $region41: #{model_forward.1} parent=1 // pred_fallthru
      _
    %1104 = vsyncpa [#allocation3], 1

</llo_original>
